<compile_context>
chip_gen: v5e
topology: v5e:2x2
jax: 0.10.0
libtpu: 0.0.40
codegen_flags: <defaults>
</compile_context>

<pallas_src>
import functools

import numpy as np
import jax
import jax.numpy as jnp
from jax import lax
from jax.experimental import pallas as pl
from jax.experimental.pallas import tpu as pltpu

# miniLeNet5 geometry (32x32 input -> conv3 yields 1x1 spatial).
IN_HW = 32        # input spatial size
K = 5             # conv kernel size (all convs)
C1, C2, C3 = 6, 16, 120
P1_H = P1_W = 14  # after conv1 (28x28) + pool1
P2_H = P2_W = 5   # after conv2 (10x10) + pool2
FC_PAD = 128      # lane-dense padding of the final Linear output
MAX_BT = 8        # max images per grid step (batch tile)


# ----------------------------------------------------------------------------
# Fused kernel: whole forward pass for a batch tile of `bt` images.
# ----------------------------------------------------------------------------
def _lenet_fused_kernel(bt, x_ref, t1e_ref, t1o_ref, b1_ref,
                        t2e_ref, t2o_ref, b2_ref,
                        t3_ref, b3_ref, wfc_ref, bfc_ref,
                        out_ref, p1_ref):
    f32 = jnp.float32

    def gather_rows(read_rows, start, size):
        # Same strided row window from every image of the tile, stacked along
        # the sublane (M) axis -> one big MXU operand (M = bt*size).
        return jnp.concatenate([read_rows(b, start, size) for b in range(bt)],
                               axis=0)

    def conv_pool(read_rows, te_ref, to_ref, rows_per_img, n_cols):
        # 5x5 valid conv (as KH banded matmuls) fused with MaxPool(2,2).
        m = bt * rows_per_img
        acc_ee = jnp.zeros((m, n_cols), f32)
        acc_eo = jnp.zeros((m, n_cols), f32)
        acc_oe = jnp.zeros((m, n_cols), f32)
        acc_oo = jnp.zeros((m, n_cols), f32)
        for ki in range(K):
            rows_e = gather_rows(read_rows, ki, rows_per_img)       # even pool rows
            rows_o = gather_rows(read_rows, ki + 1, rows_per_img)   # odd pool rows
            te = te_ref[ki]   # even output columns of the 2x2 window
            to = to_ref[ki]   # odd  output columns of the 2x2 window
            acc_ee = acc_ee + jnp.dot(rows_e, te, preferred_element_type=f32)
            acc_eo = acc_eo + jnp.dot(rows_e, to, preferred_element_type=f32)
            acc_oe = acc_oe + jnp.dot(rows_o, te, preferred_element_type=f32)
            acc_oo = acc_oo + jnp.dot(rows_o, to, preferred_element_type=f32)
        # max over the 2x2 pooling window.
        return jnp.maximum(jnp.maximum(acc_ee, acc_eo),
                           jnp.maximum(acc_oe, acc_oo))

    # conv1 + relu1 + pool1:  (bt*32, 32*Cin) -> (bt*14, 14*6), kept in VMEM scratch.
    def read_x(b, start, size):
        return x_ref[pl.ds(b * IN_HW + start, size, 2), :]

    m1 = conv_pool(read_x, t1e_ref, t1o_ref, P1_H, P1_W * C1)
    p1_ref[...] = jnp.maximum(m1 + b1_ref[...], 0.0)

    # conv2 + relu2 + pool2:  (bt*14, 14*6) -> (bt*5, 5*16), kept as a value.
    def read_p1(b, start, size):
        return p1_ref[pl.ds(b * P1_H + start, size, 2), :]

    m2 = conv_pool(read_p1, t2e_ref, t2o_ref, P2_H, P2_W * C2)
    p2 = jnp.maximum(m2 + b2_ref[...], 0.0)          # (bt*5, 5*16)

    # conv3 + relu3:          (bt*5, 5*16) -> (bt, 120)
    acc3 = jnp.zeros((bt, C3), f32)
    for ki in range(K):
        rows = jnp.concatenate(
            [p2[b * P2_H + ki: b * P2_H + ki + 1, :] for b in range(bt)], axis=0)
        acc3 = acc3 + jnp.dot(rows, t3_ref[ki], preferred_element_type=f32)
    h = jnp.maximum(acc3 + b3_ref[...], 0.0)

    # fc (120 -> num_classes, zero-padded to 128 lanes for a dense HBM store)
    logits = jnp.dot(h, wfc_ref[...], preferred_element_type=f32) + bfc_ref[...]
    out_ref[...] = logits.astype(out_ref.dtype)


# ----------------------------------------------------------------------------
# Host-side parameter preparation (done once, tiny).
# ----------------------------------------------------------------------------
def _pool_toeplitz(w_conv, in_width, out_pw, parity):
    """Banded weight for conv(valid, stride 1) fused with 2x downsample in W.

    T[ki, w*Cin+ci, pw*Cout+co] = w[co, ci, ki, w - (2*pw + parity)]
    when the kernel offset is in [0, KW), else 0.
    """
    w_np = np.asarray(w_conv, dtype=np.float32)
    cout, cin, kh, kw = w_np.shape
    t = np.zeros((kh, in_width * cin, out_pw * cout), np.float32)
    for ki in range(kh):
        for pw in range(out_pw):
            for kj in range(kw):
                w = 2 * pw + parity + kj
                if w < in_width:
                    t[ki, w * cin:(w + 1) * cin,
                      pw * cout:(pw + 1) * cout] = w_np[:, :, ki, kj].T
    return jnp.asarray(t)


def _im2col_weight(w_conv):
    # (Cout, Cin, KH, KW) -> (KH, KW*Cin, Cout), rows ordered (kj, ci).
    w_np = np.asarray(w_conv, dtype=np.float32)
    cout, cin, kh, kw = w_np.shape
    return jnp.asarray(np.transpose(w_np, (2, 3, 1, 0)).reshape(kh, kw * cin, cout))


def build_kernel_params(params, num_classes=10):
    assert num_classes <= FC_PAD
    fc_w = np.asarray(params["fc_w"], np.float32)
    fc_b = np.asarray(params["fc_b"], np.float32)
    wfc = np.zeros((C3, FC_PAD), np.float32)
    wfc[:, :num_classes] = fc_w.T
    bfc = np.zeros((1, FC_PAD), np.float32)
    bfc[0, :num_classes] = fc_b
    return {
        "t1e": _pool_toeplitz(params["conv1_w"], IN_HW, P1_W, 0),
        "t1o": _pool_toeplitz(params["conv1_w"], IN_HW, P1_W, 1),
        "b1": jnp.tile(jnp.asarray(params["conv1_b"], jnp.float32), P1_W)[None, :],
        "t2e": _pool_toeplitz(params["conv2_w"], P1_W, P2_W, 0),
        "t2o": _pool_toeplitz(params["conv2_w"], P1_W, P2_W, 1),
        "b2": jnp.tile(jnp.asarray(params["conv2_b"], jnp.float32), P2_W)[None, :],
        "t3": _im2col_weight(params["conv3_w"]),
        "b3": jnp.asarray(params["conv3_b"], jnp.float32)[None, :],
        "wfc": jnp.asarray(wfc),
        "bfc": jnp.asarray(bfc),
    }


def init_params(key, input_channels=1, num_classes=10):
    # PyTorch-layout parameters (same shapes as the nn.Module).
    ks = jax.random.split(key, 8)

    def conv_w(k, cout, cin, kk):
        fan_in = cin * kk * kk
        return (jax.random.normal(k, (cout, cin, kk, kk), jnp.float32)
                * (2.0 / fan_in) ** 0.5)

    return {
        "conv1_w": conv_w(ks[0], C1, input_channels, K),
        "conv1_b": jax.random.normal(ks[1], (C1,), jnp.float32) * 0.01,
        "conv2_w": conv_w(ks[2], C2, C1, K),
        "conv2_b": jax.random.normal(ks[3], (C2,), jnp.float32) * 0.01,
        "conv3_w": conv_w(ks[4], C3, C2, K),
        "conv3_b": jax.random.normal(ks[5], (C3,), jnp.float32) * 0.01,
        "fc_w": jax.random.normal(ks[6], (num_classes, C3), jnp.float32)
                * (1.0 / C3) ** 0.5,
        "fc_b": jax.random.normal(ks[7], (num_classes,), jnp.float32) * 0.01,
    }


# ----------------------------------------------------------------------------
# Forward pass wrapper (single pallas_call).
# ----------------------------------------------------------------------------
@functools.partial(jax.jit, static_argnames=("num_classes",))
def mini_lenet5_forward(x_nchw, kparams, num_classes=10):
    n, cin, h, w = x_nchw.shape
    assert (h, w) == (IN_HW, IN_HW), "miniLeNet5 geometry needs 32x32 input"

    # Batch tile: up to MAX_BT images per grid step (stacked along sublanes).
    bt = n if n < MAX_BT else MAX_BT
    n_pad = pl.cdiv(n, bt) * bt

    # NCHW -> (N, H, W*Cin): spatial H as sublanes, merged (W, C) as lanes.
    x2d = jnp.transpose(x_nchw, (0, 2, 3, 1)).reshape(n, IN_HW, IN_HW * cin)
    x2d = x2d.astype(jnp.float32)
    if n_pad != n:
        x2d = jnp.pad(x2d, ((0, n_pad - n), (0, 0), (0, 0)))
    x_flat = x2d.reshape(n_pad * IN_HW, IN_HW * cin)

    operands = (x_flat, kparams["t1e"], kparams["t1o"], kparams["b1"],
                kparams["t2e"], kparams["t2o"], kparams["b2"],
                kparams["t3"], kparams["b3"], kparams["wfc"], kparams["bfc"])

    const2 = lambda i: (0, 0)
    const3 = lambda i: (0, 0, 0)
    in_specs = [pl.BlockSpec((bt * IN_HW, IN_HW * cin), lambda i: (i, 0))]
    in_specs += [pl.BlockSpec(a.shape, const3 if a.ndim == 3 else const2)
                 for a in operands[1:]]

    flops = 2 * n_pad * (4 * K * P1_H * (IN_HW * cin) * (P1_W * C1)
                         + 4 * K * P2_H * (P1_W * C1) * (P2_W * C2)
                         + K * (P2_W * C2) * C3
                         + C3 * FC_PAD)
    bytes_accessed = sum(int(a.size) * 4 for a in operands) + n_pad * FC_PAD * 4

    out = pl.pallas_call(
        functools.partial(_lenet_fused_kernel, bt),
        out_shape=jax.ShapeDtypeStruct((n_pad, FC_PAD), jnp.float32),
        grid_spec=pltpu.PrefetchScalarGridSpec(
            num_scalar_prefetch=0,
            grid=(n_pad // bt,),
            in_specs=in_specs,
            out_specs=pl.BlockSpec((bt, FC_PAD), lambda i: (i, 0)),
            scratch_shapes=[pltpu.VMEM((bt * P1_H, P1_W * C1), jnp.float32)],
        ),
        compiler_params=pltpu.CompilerParams(
            dimension_semantics=("parallel",)),
        cost_estimate=pl.CostEstimate(flops=flops, transcendentals=0,
                                      bytes_accessed=bytes_accessed),
    )(*operands)

    return out[:n, :num_classes]


# ----------------------------------------------------------------------------
# Pure-JAX reference (for correctness validation only).
# ----------------------------------------------------------------------------
def mini_lenet5_reference(x_nchw, params):
    dn = ("NCHW", "OIHW", "NCHW")

    def conv(x, w, b):
        y = lax.conv_general_dilated(x, w, (1, 1), "VALID",
                                     dimension_numbers=dn,
                                     precision=lax.Precision.HIGHEST)
        return y + b[None, :, None, None]

    def pool(x):
        return lax.reduce_window(x, -jnp.inf, lax.max,
                                 (1, 1, 2, 2), (1, 1, 2, 2), "VALID")

    x = jnp.maximum(conv(x_nchw, params["conv1_w"], params["conv1_b"]), 0.0)
    x = pool(x)
    x = jnp.maximum(conv(x, params["conv2_w"], params["conv2_b"]), 0.0)
    x = pool(x)
    x = jnp.maximum(conv(x, params["conv3_w"], params["conv3_b"]), 0.0)
    x = x.reshape(x.shape[0], -1)
    return jnp.dot(x, params["fc_w"].T,
                   precision=lax.Precision.HIGHEST) + params["fc_b"]


if __name__ == "__main__":
    key = jax.random.PRNGKey(0)
    k_params, k_x = jax.random.split(key)

    params = init_params(k_params, input_channels=1, num_classes=10)
    kparams = build_kernel_params(params, num_classes=10)

    # miniLeNet5 geometry requires 32x32 spatial input (conv3 yields 1x1).
    x = jax.random.normal(k_x, (2, 1, 32, 32), jnp.float32)   # NCHW, batch=2

    logits = mini_lenet5_forward(x, kparams, num_classes=10)
    logits = jax.block_until_ready(logits)
    assert logits.shape == (2, 10), logits.shape

    ref = jax.block_until_ready(mini_lenet5_reference(x, params))
    max_err = float(jnp.max(jnp.abs(logits - ref)))
    assert jnp.allclose(logits, ref, atol=1e-3, rtol=1e-3), max_err

    print("KERNEL_OK")
</pallas_src>

<mosaic_0001>
module attributes {stable_mosaic.version = 11 : i64} {
  func.func @_lenet_fused_kernel(%arg0: i32, %arg1: memref<64x32xf32, #tpu.memory_space<vmem>>, %arg2: memref<5x32x84xf32, #tpu.memory_space<vmem>>, %arg3: memref<5x32x84xf32, #tpu.memory_space<vmem>>, %arg4: memref<1x84xf32, #tpu.memory_space<vmem>>, %arg5: memref<5x84x80xf32, #tpu.memory_space<vmem>>, %arg6: memref<5x84x80xf32, #tpu.memory_space<vmem>>, %arg7: memref<1x80xf32, #tpu.memory_space<vmem>>, %arg8: memref<5x80x120xf32, #tpu.memory_space<vmem>>, %arg9: memref<1x120xf32, #tpu.memory_space<vmem>>, %arg10: memref<120x128xf32, #tpu.memory_space<vmem>>, %arg11: memref<1x128xf32, #tpu.memory_space<vmem>>, %arg12: memref<2x128xf32, #tpu.memory_space<vmem>>, %arg13: memref<28x84xf32, #tpu.memory_space<vmem>>) attributes {dimension_semantics = [#tpu.dimension_semantics<parallel>], iteration_bounds = array<i64: 1>, scalar_prefetch = 0 : i64, scratch_operands = 1 : i64, tpu.core_type = #tpu.core_type<tc>, window_params = [{transform_indices = @transform_0, window_bounds = array<i64: 64, 32>}, {pipeline_mode = #tpu.pipeline_mode<synchronous>, transform_indices = @transform_1, window_bounds = array<i64: 5, 32, 84>}, {pipeline_mode = #tpu.pipeline_mode<synchronous>, transform_indices = @transform_2, window_bounds = array<i64: 5, 32, 84>}, {pipeline_mode = #tpu.pipeline_mode<synchronous>, transform_indices = @transform_3, window_bounds = array<i64: 1, 84>}, {pipeline_mode = #tpu.pipeline_mode<synchronous>, transform_indices = @transform_4, window_bounds = array<i64: 5, 84, 80>}, {pipeline_mode = #tpu.pipeline_mode<synchronous>, transform_indices = @transform_5, window_bounds = array<i64: 5, 84, 80>}, {pipeline_mode = #tpu.pipeline_mode<synchronous>, transform_indices = @transform_6, window_bounds = array<i64: 1, 80>}, {pipeline_mode = #tpu.pipeline_mode<synchronous>, transform_indices = @transform_7, window_bounds = array<i64: 5, 80, 120>}, {pipeline_mode = #tpu.pipeline_mode<synchronous>, transform_indices = @transform_8, window_bounds = array<i64: 1, 120>}, {pipeline_mode = #tpu.pipeline_mode<synchronous>, transform_indices = @transform_9, window_bounds = array<i64: 120, 128>}, {pipeline_mode = #tpu.pipeline_mode<synchronous>, transform_indices = @transform_10, window_bounds = array<i64: 1, 128>}, {transform_indices = @transform_11, window_bounds = array<i64: 2, 128>}]} {
    %cst = arith.constant 0.000000e+00 : f32
    %0 = vector.broadcast %cst : f32 to vector<28x84xf32>
    %cst_0 = arith.constant 0.000000e+00 : f32
    %1 = vector.broadcast %cst_0 : f32 to vector<28x84xf32>
    %cst_1 = arith.constant 0.000000e+00 : f32
    %2 = vector.broadcast %cst_1 : f32 to vector<28x84xf32>
    %cst_2 = arith.constant 0.000000e+00 : f32
    %3 = vector.broadcast %cst_2 : f32 to vector<28x84xf32>
    %c0 = arith.constant 0 : index
    %c0_3 = arith.constant 0 : index
    %4 = tpu.strided_load %arg1[%c0, %c0_3] {strides = array<i32: 2, 1>} : memref<64x32xf32, #tpu.memory_space<vmem>>, vector<14x32xf32>
    %c32 = arith.constant 32 : index
    %c0_4 = arith.constant 0 : index
    %5 = tpu.strided_load %arg1[%c32, %c0_4] {strides = array<i32: 2, 1>} : memref<64x32xf32, #tpu.memory_space<vmem>>, vector<14x32xf32>
    %6 = tpu.concatenate %4, %5 in 0 : vector<14x32xf32>, vector<14x32xf32> -> vector<28x32xf32>
    %c1 = arith.constant 1 : index
    %c0_5 = arith.constant 0 : index
    %7 = tpu.strided_load %arg1[%c1, %c0_5] {strides = array<i32: 2, 1>} : memref<64x32xf32, #tpu.memory_space<vmem>>, vector<14x32xf32>
    %c33 = arith.constant 33 : index
    %c0_6 = arith.constant 0 : index
    %8 = tpu.strided_load %arg1[%c33, %c0_6] {strides = array<i32: 2, 1>} : memref<64x32xf32, #tpu.memory_space<vmem>>, vector<14x32xf32>
    %9 = tpu.concatenate %7, %8 in 0 : vector<14x32xf32>, vector<14x32xf32> -> vector<28x32xf32>
    %c0_7 = arith.constant 0 : index
    %c0_8 = arith.constant 0 : index
    %c0_9 = arith.constant 0 : index
    %10 = vector.load %arg2[%c0_7, %c0_8, %c0_9] : memref<5x32x84xf32, #tpu.memory_space<vmem>>, vector<1x32x84xf32>
    %11 = vector.shape_cast %10 : vector<1x32x84xf32> to vector<32x84xf32>
    %c0_10 = arith.constant 0 : index
    %c0_11 = arith.constant 0 : index
    %c0_12 = arith.constant 0 : index
    %12 = vector.load %arg3[%c0_10, %c0_11, %c0_12] : memref<5x32x84xf32, #tpu.memory_space<vmem>>, vector<1x32x84xf32>
    %13 = vector.shape_cast %12 : vector<1x32x84xf32> to vector<32x84xf32>
    %cst_13 = arith.constant dense<0.000000e+00> : vector<28x84xf32>
    %14 = tpu.matmul %6, %11, %cst_13 {dimension_numbers = #tpu.dot_dimension_numbers<[1], [0], [0], [1], [0, 0, 1, 1], [], []>} : vector<28x32xf32>, vector<32x84xf32>, vector<28x84xf32> -> vector<28x84xf32>
    %15 = arith.addf %0, %14 : vector<28x84xf32>
    %cst_14 = arith.constant dense<0.000000e+00> : vector<28x84xf32>
    %16 = tpu.matmul %6, %13, %cst_14 {dimension_numbers = #tpu.dot_dimension_numbers<[1], [0], [0], [1], [0, 0, 1, 1], [], []>} : vector<28x32xf32>, vector<32x84xf32>, vector<28x84xf32> -> vector<28x84xf32>
    %17 = arith.addf %1, %16 : vector<28x84xf32>
    %cst_15 = arith.constant dense<0.000000e+00> : vector<28x84xf32>
    %18 = tpu.matmul %9, %11, %cst_15 {dimension_numbers = #tpu.dot_dimension_numbers<[1], [0], [0], [1], [0, 0, 1, 1], [], []>} : vector<28x32xf32>, vector<32x84xf32>, vector<28x84xf32> -> vector<28x84xf32>
    %19 = arith.addf %2, %18 : vector<28x84xf32>
    %cst_16 = arith.constant dense<0.000000e+00> : vector<28x84xf32>
    %20 = tpu.matmul %9, %13, %cst_16 {dimension_numbers = #tpu.dot_dimension_numbers<[1], [0], [0], [1], [0, 0, 1, 1], [], []>} : vector<28x32xf32>, vector<32x84xf32>, vector<28x84xf32> -> vector<28x84xf32>
    %21 = arith.addf %3, %20 : vector<28x84xf32>
    %c1_17 = arith.constant 1 : index
    %c0_18 = arith.constant 0 : index
    %22 = tpu.strided_load %arg1[%c1_17, %c0_18] {strides = array<i32: 2, 1>} : memref<64x32xf32, #tpu.memory_space<vmem>>, vector<14x32xf32>
    %c33_19 = arith.constant 33 : index
    %c0_20 = arith.constant 0 : index
    %23 = tpu.strided_load %arg1[%c33_19, %c0_20] {strides = array<i32: 2, 1>} : memref<64x32xf32, #tpu.memory_space<vmem>>, vector<14x32xf32>
    %24 = tpu.concatenate %22, %23 in 0 : vector<14x32xf32>, vector<14x32xf32> -> vector<28x32xf32>
    %c2 = arith.constant 2 : index
    %c0_21 = arith.constant 0 : index
    %25 = tpu.strided_load %arg1[%c2, %c0_21] {strides = array<i32: 2, 1>} : memref<64x32xf32, #tpu.memory_space<vmem>>, vector<14x32xf32>
    %c34 = arith.constant 34 : index
    %c0_22 = arith.constant 0 : index
    %26 = tpu.strided_load %arg1[%c34, %c0_22] {strides = array<i32: 2, 1>} : memref<64x32xf32, #tpu.memory_space<vmem>>, vector<14x32xf32>
    %27 = tpu.concatenate %25, %26 in 0 : vector<14x32xf32>, vector<14x32xf32> -> vector<28x32xf32>
    %c1_23 = arith.constant 1 : index
    %c0_24 = arith.constant 0 : index
    %c0_25 = arith.constant 0 : index
    %28 = vector.load %arg2[%c1_23, %c0_24, %c0_25] : memref<5x32x84xf32, #tpu.memory_space<vmem>>, vector<1x32x84xf32>
    %29 = vector.shape_cast %28 : vector<1x32x84xf32> to vector<32x84xf32>
    %c1_26 = arith.constant 1 : index
    %c0_27 = arith.constant 0 : index
    %c0_28 = arith.constant 0 : index
    %30 = vector.load %arg3[%c1_26, %c0_27, %c0_28] : memref<5x32x84xf32, #tpu.memory_space<vmem>>, vector<1x32x84xf32>
    %31 = vector.shape_cast %30 : vector<1x32x84xf32> to vector<32x84xf32>
    %cst_29 = arith.constant dense<0.000000e+00> : vector<28x84xf32>
    %32 = tpu.matmul %24, %29, %cst_29 {dimension_numbers = #tpu.dot_dimension_numbers<[1], [0], [0], [1], [0, 0, 1, 1], [], []>} : vector<28x32xf32>, vector<32x84xf32>, vector<28x84xf32> -> vector<28x84xf32>
    %33 = arith.addf %15, %32 : vector<28x84xf32>
    %cst_30 = arith.constant dense<0.000000e+00> : vector<28x84xf32>
    %34 = tpu.matmul %24, %31, %cst_30 {dimension_numbers = #tpu.dot_dimension_numbers<[1], [0], [0], [1], [0, 0, 1, 1], [], []>} : vector<28x32xf32>, vector<32x84xf32>, vector<28x84xf32> -> vector<28x84xf32>
    %35 = arith.addf %17, %34 : vector<28x84xf32>
    %cst_31 = arith.constant dense<0.000000e+00> : vector<28x84xf32>
    %36 = tpu.matmul %27, %29, %cst_31 {dimension_numbers = #tpu.dot_dimension_numbers<[1], [0], [0], [1], [0, 0, 1, 1], [], []>} : vector<28x32xf32>, vector<32x84xf32>, vector<28x84xf32> -> vector<28x84xf32>
    %37 = arith.addf %19, %36 : vector<28x84xf32>
    %cst_32 = arith.constant dense<0.000000e+00> : vector<28x84xf32>
    %38 = tpu.matmul %27, %31, %cst_32 {dimension_numbers = #tpu.dot_dimension_numbers<[1], [0], [0], [1], [0, 0, 1, 1], [], []>} : vector<28x32xf32>, vector<32x84xf32>, vector<28x84xf32> -> vector<28x84xf32>
    %39 = arith.addf %21, %38 : vector<28x84xf32>
    %c2_33 = arith.constant 2 : index
    %c0_34 = arith.constant 0 : index
    %40 = tpu.strided_load %arg1[%c2_33, %c0_34] {strides = array<i32: 2, 1>} : memref<64x32xf32, #tpu.memory_space<vmem>>, vector<14x32xf32>
    %c34_35 = arith.constant 34 : index
    %c0_36 = arith.constant 0 : index
    %41 = tpu.strided_load %arg1[%c34_35, %c0_36] {strides = array<i32: 2, 1>} : memref<64x32xf32, #tpu.memory_space<vmem>>, vector<14x32xf32>
    %42 = tpu.concatenate %40, %41 in 0 : vector<14x32xf32>, vector<14x32xf32> -> vector<28x32xf32>
    %c3 = arith.constant 3 : index
    %c0_37 = arith.constant 0 : index
    %43 = tpu.strided_load %arg1[%c3, %c0_37] {strides = array<i32: 2, 1>} : memref<64x32xf32, #tpu.memory_space<vmem>>, vector<14x32xf32>
    %c35 = arith.constant 35 : index
    %c0_38 = arith.constant 0 : index
    %44 = tpu.strided_load %arg1[%c35, %c0_38] {strides = array<i32: 2, 1>} : memref<64x32xf32, #tpu.memory_space<vmem>>, vector<14x32xf32>
    %45 = tpu.concatenate %43, %44 in 0 : vector<14x32xf32>, vector<14x32xf32> -> vector<28x32xf32>
    %c2_39 = arith.constant 2 : index
    %c0_40 = arith.constant 0 : index
    %c0_41 = arith.constant 0 : index
    %46 = vector.load %arg2[%c2_39, %c0_40, %c0_41] : memref<5x32x84xf32, #tpu.memory_space<vmem>>, vector<1x32x84xf32>
    %47 = vector.shape_cast %46 : vector<1x32x84xf32> to vector<32x84xf32>
    %c2_42 = arith.constant 2 : index
    %c0_43 = arith.constant 0 : index
    %c0_44 = arith.constant 0 : index
    %48 = vector.load %arg3[%c2_42, %c0_43, %c0_44] : memref<5x32x84xf32, #tpu.memory_space<vmem>>, vector<1x32x84xf32>
    %49 = vector.shape_cast %48 : vector<1x32x84xf32> to vector<32x84xf32>
    %cst_45 = arith.constant dense<0.000000e+00> : vector<28x84xf32>
    %50 = tpu.matmul %42, %47, %cst_45 {dimension_numbers = #tpu.dot_dimension_numbers<[1], [0], [0], [1], [0, 0, 1, 1], [], []>} : vector<28x32xf32>, vector<32x84xf32>, vector<28x84xf32> -> vector<28x84xf32>
    %51 = arith.addf %33, %50 : vector<28x84xf32>
    %cst_46 = arith.constant dense<0.000000e+00> : vector<28x84xf32>
    %52 = tpu.matmul %42, %49, %cst_46 {dimension_numbers = #tpu.dot_dimension_numbers<[1], [0], [0], [1], [0, 0, 1, 1], [], []>} : vector<28x32xf32>, vector<32x84xf32>, vector<28x84xf32> -> vector<28x84xf32>
    %53 = arith.addf %35, %52 : vector<28x84xf32>
    %cst_47 = arith.constant dense<0.000000e+00> : vector<28x84xf32>
    %54 = tpu.matmul %45, %47, %cst_47 {dimension_numbers = #tpu.dot_dimension_numbers<[1], [0], [0], [1], [0, 0, 1, 1], [], []>} : vector<28x32xf32>, vector<32x84xf32>, vector<28x84xf32> -> vector<28x84xf32>
    %55 = arith.addf %37, %54 : vector<28x84xf32>
    %cst_48 = arith.constant dense<0.000000e+00> : vector<28x84xf32>
    %56 = tpu.matmul %45, %49, %cst_48 {dimension_numbers = #tpu.dot_dimension_numbers<[1], [0], [0], [1], [0, 0, 1, 1], [], []>} : vector<28x32xf32>, vector<32x84xf32>, vector<28x84xf32> -> vector<28x84xf32>
    %57 = arith.addf %39, %56 : vector<28x84xf32>
    %c3_49 = arith.constant 3 : index
    %c0_50 = arith.constant 0 : index
    %58 = tpu.strided_load %arg1[%c3_49, %c0_50] {strides = array<i32: 2, 1>} : memref<64x32xf32, #tpu.memory_space<vmem>>, vector<14x32xf32>
    %c35_51 = arith.constant 35 : index
    %c0_52 = arith.constant 0 : index
    %59 = tpu.strided_load %arg1[%c35_51, %c0_52] {strides = array<i32: 2, 1>} : memref<64x32xf32, #tpu.memory_space<vmem>>, vector<14x32xf32>
    %60 = tpu.concatenate %58, %59 in 0 : vector<14x32xf32>, vector<14x32xf32> -> vector<28x32xf32>
    %c4 = arith.constant 4 : index
    %c0_53 = arith.constant 0 : index
    %61 = tpu.strided_load %arg1[%c4, %c0_53] {strides = array<i32: 2, 1>} : memref<64x32xf32, #tpu.memory_space<vmem>>, vector<14x32xf32>
    %c36 = arith.constant 36 : index
    %c0_54 = arith.constant 0 : index
    %62 = tpu.strided_load %arg1[%c36, %c0_54] {strides = array<i32: 2, 1>} : memref<64x32xf32, #tpu.memory_space<vmem>>, vector<14x32xf32>
    %63 = tpu.concatenate %61, %62 in 0 : vector<14x32xf32>, vector<14x32xf32> -> vector<28x32xf32>
    %c3_55 = arith.constant 3 : index
    %c0_56 = arith.constant 0 : index
    %c0_57 = arith.constant 0 : index
    %64 = vector.load %arg2[%c3_55, %c0_56, %c0_57] : memref<5x32x84xf32, #tpu.memory_space<vmem>>, vector<1x32x84xf32>
    %65 = vector.shape_cast %64 : vector<1x32x84xf32> to vector<32x84xf32>
    %c3_58 = arith.constant 3 : index
    %c0_59 = arith.constant 0 : index
    %c0_60 = arith.constant 0 : index
    %66 = vector.load %arg3[%c3_58, %c0_59, %c0_60] : memref<5x32x84xf32, #tpu.memory_space<vmem>>, vector<1x32x84xf32>
    %67 = vector.shape_cast %66 : vector<1x32x84xf32> to vector<32x84xf32>
    %cst_61 = arith.constant dense<0.000000e+00> : vector<28x84xf32>
    %68 = tpu.matmul %60, %65, %cst_61 {dimension_numbers = #tpu.dot_dimension_numbers<[1], [0], [0], [1], [0, 0, 1, 1], [], []>} : vector<28x32xf32>, vector<32x84xf32>, vector<28x84xf32> -> vector<28x84xf32>
    %69 = arith.addf %51, %68 : vector<28x84xf32>
    %cst_62 = arith.constant dense<0.000000e+00> : vector<28x84xf32>
    %70 = tpu.matmul %60, %67, %cst_62 {dimension_numbers = #tpu.dot_dimension_numbers<[1], [0], [0], [1], [0, 0, 1, 1], [], []>} : vector<28x32xf32>, vector<32x84xf32>, vector<28x84xf32> -> vector<28x84xf32>
    %71 = arith.addf %53, %70 : vector<28x84xf32>
    %cst_63 = arith.constant dense<0.000000e+00> : vector<28x84xf32>
    %72 = tpu.matmul %63, %65, %cst_63 {dimension_numbers = #tpu.dot_dimension_numbers<[1], [0], [0], [1], [0, 0, 1, 1], [], []>} : vector<28x32xf32>, vector<32x84xf32>, vector<28x84xf32> -> vector<28x84xf32>
    %73 = arith.addf %55, %72 : vector<28x84xf32>
    %cst_64 = arith.constant dense<0.000000e+00> : vector<28x84xf32>
    %74 = tpu.matmul %63, %67, %cst_64 {dimension_numbers = #tpu.dot_dimension_numbers<[1], [0], [0], [1], [0, 0, 1, 1], [], []>} : vector<28x32xf32>, vector<32x84xf32>, vector<28x84xf32> -> vector<28x84xf32>
    %75 = arith.addf %57, %74 : vector<28x84xf32>
    %c4_65 = arith.constant 4 : index
    %c0_66 = arith.constant 0 : index
    %76 = tpu.strided_load %arg1[%c4_65, %c0_66] {strides = array<i32: 2, 1>} : memref<64x32xf32, #tpu.memory_space<vmem>>, vector<14x32xf32>
    %c36_67 = arith.constant 36 : index
    %c0_68 = arith.constant 0 : index
    %77 = tpu.strided_load %arg1[%c36_67, %c0_68] {strides = array<i32: 2, 1>} : memref<64x32xf32, #tpu.memory_space<vmem>>, vector<14x32xf32>
    %78 = tpu.concatenate %76, %77 in 0 : vector<14x32xf32>, vector<14x32xf32> -> vector<28x32xf32>
    %c5 = arith.constant 5 : index
    %c0_69 = arith.constant 0 : index
    %79 = tpu.strided_load %arg1[%c5, %c0_69] {strides = array<i32: 2, 1>} : memref<64x32xf32, #tpu.memory_space<vmem>>, vector<14x32xf32>
    %c37 = arith.constant 37 : index
    %c0_70 = arith.constant 0 : index
    %80 = tpu.strided_load %arg1[%c37, %c0_70] {strides = array<i32: 2, 1>} : memref<64x32xf32, #tpu.memory_space<vmem>>, vector<14x32xf32>
    %81 = tpu.concatenate %79, %80 in 0 : vector<14x32xf32>, vector<14x32xf32> -> vector<28x32xf32>
    %c4_71 = arith.constant 4 : index
    %c0_72 = arith.constant 0 : index
    %c0_73 = arith.constant 0 : index
    %82 = vector.load %arg2[%c4_71, %c0_72, %c0_73] : memref<5x32x84xf32, #tpu.memory_space<vmem>>, vector<1x32x84xf32>
    %83 = vector.shape_cast %82 : vector<1x32x84xf32> to vector<32x84xf32>
    %c4_74 = arith.constant 4 : index
    %c0_75 = arith.constant 0 : index
    %c0_76 = arith.constant 0 : index
    %84 = vector.load %arg3[%c4_74, %c0_75, %c0_76] : memref<5x32x84xf32, #tpu.memory_space<vmem>>, vector<1x32x84xf32>
    %85 = vector.shape_cast %84 : vector<1x32x84xf32> to vector<32x84xf32>
    %cst_77 = arith.constant dense<0.000000e+00> : vector<28x84xf32>
    %86 = tpu.matmul %78, %83, %cst_77 {dimension_numbers = #tpu.dot_dimension_numbers<[1], [0], [0], [1], [0, 0, 1, 1], [], []>} : vector<28x32xf32>, vector<32x84xf32>, vector<28x84xf32> -> vector<28x84xf32>
    %87 = arith.addf %69, %86 : vector<28x84xf32>
    %cst_78 = arith.constant dense<0.000000e+00> : vector<28x84xf32>
    %88 = tpu.matmul %78, %85, %cst_78 {dimension_numbers = #tpu.dot_dimension_numbers<[1], [0], [0], [1], [0, 0, 1, 1], [], []>} : vector<28x32xf32>, vector<32x84xf32>, vector<28x84xf32> -> vector<28x84xf32>
    %89 = arith.addf %71, %88 : vector<28x84xf32>
    %cst_79 = arith.constant dense<0.000000e+00> : vector<28x84xf32>
    %90 = tpu.matmul %81, %83, %cst_79 {dimension_numbers = #tpu.dot_dimension_numbers<[1], [0], [0], [1], [0, 0, 1, 1], [], []>} : vector<28x32xf32>, vector<32x84xf32>, vector<28x84xf32> -> vector<28x84xf32>
    %91 = arith.addf %73, %90 : vector<28x84xf32>
    %cst_80 = arith.constant dense<0.000000e+00> : vector<28x84xf32>
    %92 = tpu.matmul %81, %85, %cst_80 {dimension_numbers = #tpu.dot_dimension_numbers<[1], [0], [0], [1], [0, 0, 1, 1], [], []>} : vector<28x32xf32>, vector<32x84xf32>, vector<28x84xf32> -> vector<28x84xf32>
    %93 = arith.addf %75, %92 : vector<28x84xf32>
    %94 = arith.maximumf %87, %89 : vector<28x84xf32>
    %95 = arith.maximumf %91, %93 : vector<28x84xf32>
    %96 = arith.maximumf %94, %95 : vector<28x84xf32>
    %c0_81 = arith.constant 0 : index
    %c0_82 = arith.constant 0 : index
    %97 = vector.load %arg4[%c0_81, %c0_82] : memref<1x84xf32, #tpu.memory_space<vmem>>, vector<1x84xf32>
    %98 = vector.broadcast %97 : vector<1x84xf32> to vector<28x84xf32>
    %99 = arith.addf %96, %98 : vector<28x84xf32>
    %cst_83 = arith.constant 0.000000e+00 : f32
    %100 = vector.broadcast %cst_83 : f32 to vector<28x84xf32>
    %101 = arith.maximumf %99, %100 : vector<28x84xf32>
    %c0_84 = arith.constant 0 : index
    %c0_85 = arith.constant 0 : index
    %102 = vector.load %arg13[%c0_84, %c0_85] : memref<28x84xf32, #tpu.memory_space<vmem>>, vector<28x84xf32>
    tpu.vector_store %arg13[%c0_84, %c0_85], %101 {strides = array<i32>} : memref<28x84xf32, #tpu.memory_space<vmem>>, vector<28x84xf32>,
    %cst_86 = arith.constant 0.000000e+00 : f32
    %103 = vector.broadcast %cst_86 : f32 to vector<10x80xf32>
    %cst_87 = arith.constant 0.000000e+00 : f32
    %104 = vector.broadcast %cst_87 : f32 to vector<10x80xf32>
    %cst_88 = arith.constant 0.000000e+00 : f32
    %105 = vector.broadcast %cst_88 : f32 to vector<10x80xf32>
    %cst_89 = arith.constant 0.000000e+00 : f32
    %106 = vector.broadcast %cst_89 : f32 to vector<10x80xf32>
    %c0_90 = arith.constant 0 : index
    %c0_91 = arith.constant 0 : index
    %107 = tpu.strided_load %arg13[%c0_90, %c0_91] {strides = array<i32: 2, 1>} : memref<28x84xf32, #tpu.memory_space<vmem>>, vector<5x84xf32>
    %c14 = arith.constant 14 : index
    %c0_92 = arith.constant 0 : index
    %108 = tpu.strided_load %arg13[%c14, %c0_92] {strides = array<i32: 2, 1>} : memref<28x84xf32, #tpu.memory_space<vmem>>, vector<5x84xf32>
    %109 = tpu.concatenate %107, %108 in 0 : vector<5x84xf32>, vector<5x84xf32> -> vector<10x84xf32>
    %c1_93 = arith.constant 1 : index
    %c0_94 = arith.constant 0 : index
    %110 = tpu.strided_load %arg13[%c1_93, %c0_94] {strides = array<i32: 2, 1>} : memref<28x84xf32, #tpu.memory_space<vmem>>, vector<5x84xf32>
    %c15 = arith.constant 15 : index
    %c0_95 = arith.constant 0 : index
    %111 = tpu.strided_load %arg13[%c15, %c0_95] {strides = array<i32: 2, 1>} : memref<28x84xf32, #tpu.memory_space<vmem>>, vector<5x84xf32>
    %112 = tpu.concatenate %110, %111 in 0 : vector<5x84xf32>, vector<5x84xf32> -> vector<10x84xf32>
    %c0_96 = arith.constant 0 : index
    %c0_97 = arith.constant 0 : index
    %c0_98 = arith.constant 0 : index
    %113 = vector.load %arg5[%c0_96, %c0_97, %c0_98] : memref<5x84x80xf32, #tpu.memory_space<vmem>>, vector<1x84x80xf32>
    %114 = vector.shape_cast %113 : vector<1x84x80xf32> to vector<84x80xf32>
    %c0_99 = arith.constant 0 : index
    %c0_100 = arith.constant 0 : index
    %c0_101 = arith.constant 0 : index
    %115 = vector.load %arg6[%c0_99, %c0_100, %c0_101] : memref<5x84x80xf32, #tpu.memory_space<vmem>>, vector<1x84x80xf32>
    %116 = vector.shape_cast %115 : vector<1x84x80xf32> to vector<84x80xf32>
    %cst_102 = arith.constant dense<0.000000e+00> : vector<10x80xf32>
    %117 = tpu.matmul %109, %114, %cst_102 {dimension_numbers = #tpu.dot_dimension_numbers<[1], [0], [0], [1], [0, 0, 1, 1], [], []>} : vector<10x84xf32>, vector<84x80xf32>, vector<10x80xf32> -> vector<10x80xf32>
    %118 = arith.addf %103, %117 : vector<10x80xf32>
    %cst_103 = arith.constant dense<0.000000e+00> : vector<10x80xf32>
    %119 = tpu.matmul %109, %116, %cst_103 {dimension_numbers = #tpu.dot_dimension_numbers<[1], [0], [0], [1], [0, 0, 1, 1], [], []>} : vector<10x84xf32>, vector<84x80xf32>, vector<10x80xf32> -> vector<10x80xf32>
    %120 = arith.addf %104, %119 : vector<10x80xf32>
    %cst_104 = arith.constant dense<0.000000e+00> : vector<10x80xf32>
    %121 = tpu.matmul %112, %114, %cst_104 {dimension_numbers = #tpu.dot_dimension_numbers<[1], [0], [0], [1], [0, 0, 1, 1], [], []>} : vector<10x84xf32>, vector<84x80xf32>, vector<10x80xf32> -> vector<10x80xf32>
    %122 = arith.addf %105, %121 : vector<10x80xf32>
    %cst_105 = arith.constant dense<0.000000e+00> : vector<10x80xf32>
    %123 = tpu.matmul %112, %116, %cst_105 {dimension_numbers = #tpu.dot_dimension_numbers<[1], [0], [0], [1], [0, 0, 1, 1], [], []>} : vector<10x84xf32>, vector<84x80xf32>, vector<10x80xf32> -> vector<10x80xf32>
    %124 = arith.addf %106, %123 : vector<10x80xf32>
    %c1_106 = arith.constant 1 : index
    %c0_107 = arith.constant 0 : index
    %125 = tpu.strided_load %arg13[%c1_106, %c0_107] {strides = array<i32: 2, 1>} : memref<28x84xf32, #tpu.memory_space<vmem>>, vector<5x84xf32>
    %c15_108 = arith.constant 15 : index
    %c0_109 = arith.constant 0 : index
    %126 = tpu.strided_load %arg13[%c15_108, %c0_109] {strides = array<i32: 2, 1>} : memref<28x84xf32, #tpu.memory_space<vmem>>, vector<5x84xf32>
    %127 = tpu.concatenate %125, %126 in 0 : vector<5x84xf32>, vector<5x84xf32> -> vector<10x84xf32>
    %c2_110 = arith.constant 2 : index
    %c0_111 = arith.constant 0 : index
    %128 = tpu.strided_load %arg13[%c2_110, %c0_111] {strides = array<i32: 2, 1>} : memref<28x84xf32, #tpu.memory_space<vmem>>, vector<5x84xf32>
    %c16 = arith.constant 16 : index
    %c0_112 = arith.constant 0 : index
    %129 = tpu.strided_load %arg13[%c16, %c0_112] {strides = array<i32: 2, 1>} : memref<28x84xf32, #tpu.memory_space<vmem>>, vector<5x84xf32>
    %130 = tpu.concatenate %128, %129 in 0 : vector<5x84xf32>, vector<5x84xf32> -> vector<10x84xf32>
    %c1_113 = arith.constant 1 : index
    %c0_114 = arith.constant 0 : index
    %c0_115 = arith.constant 0 : index
    %131 = vector.load %arg5[%c1_113, %c0_114, %c0_115] : memref<5x84x80xf32, #tpu.memory_space<vmem>>, vector<1x84x80xf32>
    %132 = vector.shape_cast %131 : vector<1x84x80xf32> to vector<84x80xf32>
    %c1_116 = arith.constant 1 : index
    %c0_117 = arith.constant 0 : index
    %c0_118 = arith.constant 0 : index
    %133 = vector.load %arg6[%c1_116, %c0_117, %c0_118] : memref<5x84x80xf32, #tpu.memory_space<vmem>>, vector<1x84x80xf32>
    %134 = vector.shape_cast %133 : vector<1x84x80xf32> to vector<84x80xf32>
    %cst_119 = arith.constant dense<0.000000e+00> : vector<10x80xf32>
    %135 = tpu.matmul %127, %132, %cst_119 {dimension_numbers = #tpu.dot_dimension_numbers<[1], [0], [0], [1], [0, 0, 1, 1], [], []>} : vector<10x84xf32>, vector<84x80xf32>, vector<10x80xf32> -> vector<10x80xf32>
    %136 = arith.addf %118, %135 : vector<10x80xf32>
    %cst_120 = arith.constant dense<0.000000e+00> : vector<10x80xf32>
    %137 = tpu.matmul %127, %134, %cst_120 {dimension_numbers = #tpu.dot_dimension_numbers<[1], [0], [0], [1], [0, 0, 1, 1], [], []>} : vector<10x84xf32>, vector<84x80xf32>, vector<10x80xf32> -> vector<10x80xf32>
    %138 = arith.addf %120, %137 : vector<10x80xf32>
    %cst_121 = arith.constant dense<0.000000e+00> : vector<10x80xf32>
    %139 = tpu.matmul %130, %132, %cst_121 {dimension_numbers = #tpu.dot_dimension_numbers<[1], [0], [0], [1], [0, 0, 1, 1], [], []>} : vector<10x84xf32>, vector<84x80xf32>, vector<10x80xf32> -> vector<10x80xf32>
    %140 = arith.addf %122, %139 : vector<10x80xf32>
    %cst_122 = arith.constant dense<0.000000e+00> : vector<10x80xf32>
    %141 = tpu.matmul %130, %134, %cst_122 {dimension_numbers = #tpu.dot_dimension_numbers<[1], [0], [0], [1], [0, 0, 1, 1], [], []>} : vector<10x84xf32>, vector<84x80xf32>, vector<10x80xf32> -> vector<10x80xf32>
    %142 = arith.addf %124, %141 : vector<10x80xf32>
    %c2_123 = arith.constant 2 : index
    %c0_124 = arith.constant 0 : index
    %143 = tpu.strided_load %arg13[%c2_123, %c0_124] {strides = array<i32: 2, 1>} : memref<28x84xf32, #tpu.memory_space<vmem>>, vector<5x84xf32>
    %c16_125 = arith.constant 16 : index
    %c0_126 = arith.constant 0 : index
    %144 = tpu.strided_load %arg13[%c16_125, %c0_126] {strides = array<i32: 2, 1>} : memref<28x84xf32, #tpu.memory_space<vmem>>, vector<5x84xf32>
    %145 = tpu.concatenate %143, %144 in 0 : vector<5x84xf32>, vector<5x84xf32> -> vector<10x84xf32>
    %c3_127 = arith.constant 3 : index
    %c0_128 = arith.constant 0 : index
    %146 = tpu.strided_load %arg13[%c3_127, %c0_128] {strides = array<i32: 2, 1>} : memref<28x84xf32, #tpu.memory_space<vmem>>, vector<5x84xf32>
    %c17 = arith.constant 17 : index
    %c0_129 = arith.constant 0 : index
    %147 = tpu.strided_load %arg13[%c17, %c0_129] {strides = array<i32: 2, 1>} : memref<28x84xf32, #tpu.memory_space<vmem>>, vector<5x84xf32>
    %148 = tpu.concatenate %146, %147 in 0 : vector<5x84xf32>, vector<5x84xf32> -> vector<10x84xf32>
    %c2_130 = arith.constant 2 : index
    %c0_131 = arith.constant 0 : index
    %c0_132 = arith.constant 0 : index
    %149 = vector.load %arg5[%c2_130, %c0_131, %c0_132] : memref<5x84x80xf32, #tpu.memory_space<vmem>>, vector<1x84x80xf32>
    %150 = vector.shape_cast %149 : vector<1x84x80xf32> to vector<84x80xf32>
    %c2_133 = arith.constant 2 : index
    %c0_134 = arith.constant 0 : index
    %c0_135 = arith.constant 0 : index
    %151 = vector.load %arg6[%c2_133, %c0_134, %c0_135] : memref<5x84x80xf32, #tpu.memory_space<vmem>>, vector<1x84x80xf32>
    %152 = vector.shape_cast %151 : vector<1x84x80xf32> to vector<84x80xf32>
    %cst_136 = arith.constant dense<0.000000e+00> : vector<10x80xf32>
    %153 = tpu.matmul %145, %150, %cst_136 {dimension_numbers = #tpu.dot_dimension_numbers<[1], [0], [0], [1], [0, 0, 1, 1], [], []>} : vector<10x84xf32>, vector<84x80xf32>, vector<10x80xf32> -> vector<10x80xf32>
    %154 = arith.addf %136, %153 : vector<10x80xf32>
    %cst_137 = arith.constant dense<0.000000e+00> : vector<10x80xf32>
    %155 = tpu.matmul %145, %152, %cst_137 {dimension_numbers = #tpu.dot_dimension_numbers<[1], [0], [0], [1], [0, 0, 1, 1], [], []>} : vector<10x84xf32>, vector<84x80xf32>, vector<10x80xf32> -> vector<10x80xf32>
    %156 = arith.addf %138, %155 : vector<10x80xf32>
    %cst_138 = arith.constant dense<0.000000e+00> : vector<10x80xf32>
    %157 = tpu.matmul %148, %150, %cst_138 {dimension_numbers = #tpu.dot_dimension_numbers<[1], [0], [0], [1], [0, 0, 1, 1], [], []>} : vector<10x84xf32>, vector<84x80xf32>, vector<10x80xf32> -> vector<10x80xf32>
    %158 = arith.addf %140, %157 : vector<10x80xf32>
    %cst_139 = arith.constant dense<0.000000e+00> : vector<10x80xf32>
    %159 = tpu.matmul %148, %152, %cst_139 {dimension_numbers = #tpu.dot_dimension_numbers<[1], [0], [0], [1], [0, 0, 1, 1], [], []>} : vector<10x84xf32>, vector<84x80xf32>, vector<10x80xf32> -> vector<10x80xf32>
    %160 = arith.addf %142, %159 : vector<10x80xf32>
    %c3_140 = arith.constant 3 : index
    %c0_141 = arith.constant 0 : index
    %161 = tpu.strided_load %arg13[%c3_140, %c0_141] {strides = array<i32: 2, 1>} : memref<28x84xf32, #tpu.memory_space<vmem>>, vector<5x84xf32>
    %c17_142 = arith.constant 17 : index
    %c0_143 = arith.constant 0 : index
    %162 = tpu.strided_load %arg13[%c17_142, %c0_143] {strides = array<i32: 2, 1>} : memref<28x84xf32, #tpu.memory_space<vmem>>, vector<5x84xf32>
    %163 = tpu.concatenate %161, %162 in 0 : vector<5x84xf32>, vector<5x84xf32> -> vector<10x84xf32>
    %c4_144 = arith.constant 4 : index
    %c0_145 = arith.constant 0 : index
    %164 = tpu.strided_load %arg13[%c4_144, %c0_145] {strides = array<i32: 2, 1>} : memref<28x84xf32, #tpu.memory_space<vmem>>, vector<5x84xf32>
    %c18 = arith.constant 18 : index
    %c0_146 = arith.constant 0 : index
    %165 = tpu.strided_load %arg13[%c18, %c0_146] {strides = array<i32: 2, 1>} : memref<28x84xf32, #tpu.memory_space<vmem>>, vector<5x84xf32>
    %166 = tpu.concatenate %164, %165 in 0 : vector<5x84xf32>, vector<5x84xf32> -> vector<10x84xf32>
    %c3_147 = arith.constant 3 : index
    %c0_148 = arith.constant 0 : index
    %c0_149 = arith.constant 0 : index
    %167 = vector.load %arg5[%c3_147, %c0_148, %c0_149] : memref<5x84x80xf32, #tpu.memory_space<vmem>>, vector<1x84x80xf32>
    %168 = vector.shape_cast %167 : vector<1x84x80xf32> to vector<84x80xf32>
    %c3_150 = arith.constant 3 : index
    %c0_151 = arith.constant 0 : index
    %c0_152 = arith.constant 0 : index
    %169 = vector.load %arg6[%c3_150, %c0_151, %c0_152] : memref<5x84x80xf32, #tpu.memory_space<vmem>>, vector<1x84x80xf32>
    %170 = vector.shape_cast %169 : vector<1x84x80xf32> to vector<84x80xf32>
    %cst_153 = arith.constant dense<0.000000e+00> : vector<10x80xf32>
    %171 = tpu.matmul %163, %168, %cst_153 {dimension_numbers = #tpu.dot_dimension_numbers<[1], [0], [0], [1], [0, 0, 1, 1], [], []>} : vector<10x84xf32>, vector<84x80xf32>, vector<10x80xf32> -> vector<10x80xf32>
    %172 = arith.addf %154, %171 : vector<10x80xf32>
    %cst_154 = arith.constant dense<0.000000e+00> : vector<10x80xf32>
    %173 = tpu.matmul %163, %170, %cst_154 {dimension_numbers = #tpu.dot_dimension_numbers<[1], [0], [0], [1], [0, 0, 1, 1], [], []>} : vector<10x84xf32>, vector<84x80xf32>, vector<10x80xf32> -> vector<10x80xf32>
    %174 = arith.addf %156, %173 : vector<10x80xf32>
    %cst_155 = arith.constant dense<0.000000e+00> : vector<10x80xf32>
    %175 = tpu.matmul %166, %168, %cst_155 {dimension_numbers = #tpu.dot_dimension_numbers<[1], [0], [0], [1], [0, 0, 1, 1], [], []>} : vector<10x84xf32>, vector<84x80xf32>, vector<10x80xf32> -> vector<10x80xf32>
    %176 = arith.addf %158, %175 : vector<10x80xf32>
    %cst_156 = arith.constant dense<0.000000e+00> : vector<10x80xf32>
    %177 = tpu.matmul %166, %170, %cst_156 {dimension_numbers = #tpu.dot_dimension_numbers<[1], [0], [0], [1], [0, 0, 1, 1], [], []>} : vector<10x84xf32>, vector<84x80xf32>, vector<10x80xf32> -> vector<10x80xf32>
    %178 = arith.addf %160, %177 : vector<10x80xf32>
    %c4_157 = arith.constant 4 : index
    %c0_158 = arith.constant 0 : index
    %179 = tpu.strided_load %arg13[%c4_157, %c0_158] {strides = array<i32: 2, 1>} : memref<28x84xf32, #tpu.memory_space<vmem>>, vector<5x84xf32>
    %c18_159 = arith.constant 18 : index
    %c0_160 = arith.constant 0 : index
    %180 = tpu.strided_load %arg13[%c18_159, %c0_160] {strides = array<i32: 2, 1>} : memref<28x84xf32, #tpu.memory_space<vmem>>, vector<5x84xf32>
    %181 = tpu.concatenate %179, %180 in 0 : vector<5x84xf32>, vector<5x84xf32> -> vector<10x84xf32>
    %c5_161 = arith.constant 5 : index
    %c0_162 = arith.constant 0 : index
    %182 = tpu.strided_load %arg13[%c5_161, %c0_162] {strides = array<i32: 2, 1>} : memref<28x84xf32, #tpu.memory_space<vmem>>, vector<5x84xf32>
    %c19 = arith.constant 19 : index
    %c0_163 = arith.constant 0 : index
    %183 = tpu.strided_load %arg13[%c19, %c0_163] {strides = array<i32: 2, 1>} : memref<28x84xf32, #tpu.memory_space<vmem>>, vector<5x84xf32>
    %184 = tpu.concatenate %182, %183 in 0 : vector<5x84xf32>, vector<5x84xf32> -> vector<10x84xf32>
    %c4_164 = arith.constant 4 : index
    %c0_165 = arith.constant 0 : index
    %c0_166 = arith.constant 0 : index
    %185 = vector.load %arg5[%c4_164, %c0_165, %c0_166] : memref<5x84x80xf32, #tpu.memory_space<vmem>>, vector<1x84x80xf32>
    %186 = vector.shape_cast %185 : vector<1x84x80xf32> to vector<84x80xf32>
    %c4_167 = arith.constant 4 : index
    %c0_168 = arith.constant 0 : index
    %c0_169 = arith.constant 0 : index
    %187 = vector.load %arg6[%c4_167, %c0_168, %c0_169] : memref<5x84x80xf32, #tpu.memory_space<vmem>>, vector<1x84x80xf32>
    %188 = vector.shape_cast %187 : vector<1x84x80xf32> to vector<84x80xf32>
    %cst_170 = arith.constant dense<0.000000e+00> : vector<10x80xf32>
    %189 = tpu.matmul %181, %186, %cst_170 {dimension_numbers = #tpu.dot_dimension_numbers<[1], [0], [0], [1], [0, 0, 1, 1], [], []>} : vector<10x84xf32>, vector<84x80xf32>, vector<10x80xf32> -> vector<10x80xf32>
    %190 = arith.addf %172, %189 : vector<10x80xf32>
    %cst_171 = arith.constant dense<0.000000e+00> : vector<10x80xf32>
    %191 = tpu.matmul %181, %188, %cst_171 {dimension_numbers = #tpu.dot_dimension_numbers<[1], [0], [0], [1], [0, 0, 1, 1], [], []>} : vector<10x84xf32>, vector<84x80xf32>, vector<10x80xf32> -> vector<10x80xf32>
    %192 = arith.addf %174, %191 : vector<10x80xf32>
    %cst_172 = arith.constant dense<0.000000e+00> : vector<10x80xf32>
    %193 = tpu.matmul %184, %186, %cst_172 {dimension_numbers = #tpu.dot_dimension_numbers<[1], [0], [0], [1], [0, 0, 1, 1], [], []>} : vector<10x84xf32>, vector<84x80xf32>, vector<10x80xf32> -> vector<10x80xf32>
    %194 = arith.addf %176, %193 : vector<10x80xf32>
    %cst_173 = arith.constant dense<0.000000e+00> : vector<10x80xf32>
    %195 = tpu.matmul %184, %188, %cst_173 {dimension_numbers = #tpu.dot_dimension_numbers<[1], [0], [0], [1], [0, 0, 1, 1], [], []>} : vector<10x84xf32>, vector<84x80xf32>, vector<10x80xf32> -> vector<10x80xf32>
    %196 = arith.addf %178, %195 : vector<10x80xf32>
    %197 = arith.maximumf %190, %192 : vector<10x80xf32>
    %198 = arith.maximumf %194, %196 : vector<10x80xf32>
    %199 = arith.maximumf %197, %198 : vector<10x80xf32>
    %c0_174 = arith.constant 0 : index
    %c0_175 = arith.constant 0 : index
    %200 = vector.load %arg7[%c0_174, %c0_175] : memref<1x80xf32, #tpu.memory_space<vmem>>, vector<1x80xf32>
    %201 = vector.broadcast %200 : vector<1x80xf32> to vector<10x80xf32>
    %202 = arith.addf %199, %201 : vector<10x80xf32>
    %cst_176 = arith.constant 0.000000e+00 : f32
    %203 = vector.broadcast %cst_176 : f32 to vector<10x80xf32>
    %204 = arith.maximumf %202, %203 : vector<10x80xf32>
    %cst_177 = arith.constant 0.000000e+00 : f32
    %205 = vector.broadcast %cst_177 : f32 to vector<2x120xf32>
    %206 = vector.extract_strided_slice %204 {offsets = [0, 0], sizes = [1, 80], strides = [1, 1]} : vector<10x80xf32> to vector<1x80xf32>
    %207 = vector.extract_strided_slice %204 {offsets = [5, 0], sizes = [1, 80], strides = [1, 1]} : vector<10x80xf32> to vector<1x80xf32>
    %208 = tpu.concatenate %206, %207 in 0 : vector<1x80xf32>, vector<1x80xf32> -> vector<2x80xf32>
    %c0_178 = arith.constant 0 : index
    %c0_179 = arith.constant 0 : index
    %c0_180 = arith.constant 0 : index
    %209 = vector.load %arg8[%c0_178, %c0_179, %c0_180] : memref<5x80x120xf32, #tpu.memory_space<vmem>>, vector<1x80x120xf32>
    %210 = vector.shape_cast %209 : vector<1x80x120xf32> to vector<80x120xf32>
    %cst_181 = arith.constant dense<0.000000e+00> : vector<2x120xf32>
    %211 = tpu.matmul %208, %210, %cst_181 {dimension_numbers = #tpu.dot_dimension_numbers<[1], [0], [0], [1], [0, 0, 1, 1], [], []>} : vector<2x80xf32>, vector<80x120xf32>, vector<2x120xf32> -> vector<2x120xf32>
    %212 = arith.addf %205, %211 : vector<2x120xf32>
    %213 = vector.extract_strided_slice %204 {offsets = [1, 0], sizes = [1, 80], strides = [1, 1]} : vector<10x80xf32> to vector<1x80xf32>
    %214 = vector.extract_strided_slice %204 {offsets = [6, 0], sizes = [1, 80], strides = [1, 1]} : vector<10x80xf32> to vector<1x80xf32>
    %215 = tpu.concatenate %213, %214 in 0 : vector<1x80xf32>, vector<1x80xf32> -> vector<2x80xf32>
    %c1_182 = arith.constant 1 : index
    %c0_183 = arith.constant 0 : index
    %c0_184 = arith.constant 0 : index
    %216 = vector.load %arg8[%c1_182, %c0_183, %c0_184] : memref<5x80x120xf32, #tpu.memory_space<vmem>>, vector<1x80x120xf32>
    %217 = vector.shape_cast %216 : vector<1x80x120xf32> to vector<80x120xf32>
    %cst_185 = arith.constant dense<0.000000e+00> : vector<2x120xf32>
    %218 = tpu.matmul %215, %217, %cst_185 {dimension_numbers = #tpu.dot_dimension_numbers<[1], [0], [0], [1], [0, 0, 1, 1], [], []>} : vector<2x80xf32>, vector<80x120xf32>, vector<2x120xf32> -> vector<2x120xf32>
    %219 = arith.addf %212, %218 : vector<2x120xf32>
    %220 = vector.extract_strided_slice %204 {offsets = [2, 0], sizes = [1, 80], strides = [1, 1]} : vector<10x80xf32> to vector<1x80xf32>
    %221 = vector.extract_strided_slice %204 {offsets = [7, 0], sizes = [1, 80], strides = [1, 1]} : vector<10x80xf32> to vector<1x80xf32>
    %222 = tpu.concatenate %220, %221 in 0 : vector<1x80xf32>, vector<1x80xf32> -> vector<2x80xf32>
    %c2_186 = arith.constant 2 : index
    %c0_187 = arith.constant 0 : index
    %c0_188 = arith.constant 0 : index
    %223 = vector.load %arg8[%c2_186, %c0_187, %c0_188] : memref<5x80x120xf32, #tpu.memory_space<vmem>>, vector<1x80x120xf32>
    %224 = vector.shape_cast %223 : vector<1x80x120xf32> to vector<80x120xf32>
    %cst_189 = arith.constant dense<0.000000e+00> : vector<2x120xf32>
    %225 = tpu.matmul %222, %224, %cst_189 {dimension_numbers = #tpu.dot_dimension_numbers<[1], [0], [0], [1], [0, 0, 1, 1], [], []>} : vector<2x80xf32>, vector<80x120xf32>, vector<2x120xf32> -> vector<2x120xf32>
    %226 = arith.addf %219, %225 : vector<2x120xf32>
    %227 = vector.extract_strided_slice %204 {offsets = [3, 0], sizes = [1, 80], strides = [1, 1]} : vector<10x80xf32> to vector<1x80xf32>
    %228 = vector.extract_strided_slice %204 {offsets = [8, 0], sizes = [1, 80], strides = [1, 1]} : vector<10x80xf32> to vector<1x80xf32>
    %229 = tpu.concatenate %227, %228 in 0 : vector<1x80xf32>, vector<1x80xf32> -> vector<2x80xf32>
    %c3_190 = arith.constant 3 : index
    %c0_191 = arith.constant 0 : index
    %c0_192 = arith.constant 0 : index
    %230 = vector.load %arg8[%c3_190, %c0_191, %c0_192] : memref<5x80x120xf32, #tpu.memory_space<vmem>>, vector<1x80x120xf32>
    %231 = vector.shape_cast %230 : vector<1x80x120xf32> to vector<80x120xf32>
    %cst_193 = arith.constant dense<0.000000e+00> : vector<2x120xf32>
    %232 = tpu.matmul %229, %231, %cst_193 {dimension_numbers = #tpu.dot_dimension_numbers<[1], [0], [0], [1], [0, 0, 1, 1], [], []>} : vector<2x80xf32>, vector<80x120xf32>, vector<2x120xf32> -> vector<2x120xf32>
    %233 = arith.addf %226, %232 : vector<2x120xf32>
    %234 = vector.extract_strided_slice %204 {offsets = [4, 0], sizes = [1, 80], strides = [1, 1]} : vector<10x80xf32> to vector<1x80xf32>
    %235 = vector.extract_strided_slice %204 {offsets = [9, 0], sizes = [1, 80], strides = [1, 1]} : vector<10x80xf32> to vector<1x80xf32>
    %236 = tpu.concatenate %234, %235 in 0 : vector<1x80xf32>, vector<1x80xf32> -> vector<2x80xf32>
    %c4_194 = arith.constant 4 : index
    %c0_195 = arith.constant 0 : index
    %c0_196 = arith.constant 0 : index
    %237 = vector.load %arg8[%c4_194, %c0_195, %c0_196] : memref<5x80x120xf32, #tpu.memory_space<vmem>>, vector<1x80x120xf32>
    %238 = vector.shape_cast %237 : vector<1x80x120xf32> to vector<80x120xf32>
    %cst_197 = arith.constant dense<0.000000e+00> : vector<2x120xf32>
    %239 = tpu.matmul %236, %238, %cst_197 {dimension_numbers = #tpu.dot_dimension_numbers<[1], [0], [0], [1], [0, 0, 1, 1], [], []>} : vector<2x80xf32>, vector<80x120xf32>, vector<2x120xf32> -> vector<2x120xf32>
    %240 = arith.addf %233, %239 : vector<2x120xf32>
    %c0_198 = arith.constant 0 : index
    %c0_199 = arith.constant 0 : index
    %241 = vector.load %arg9[%c0_198, %c0_199] : memref<1x120xf32, #tpu.memory_space<vmem>>, vector<1x120xf32>
    %242 = vector.broadcast %241 : vector<1x120xf32> to vector<2x120xf32>
    %243 = arith.addf %240, %242 : vector<2x120xf32>
    %cst_200 = arith.constant 0.000000e+00 : f32
    %244 = vector.broadcast %cst_200 : f32 to vector<2x120xf32>
    %245 = arith.maximumf %243, %244 : vector<2x120xf32>
    %c0_201 = arith.constant 0 : index
    %c0_202 = arith.constant 0 : index
    %246 = vector.load %arg10[%c0_201, %c0_202] : memref<120x128xf32, #tpu.memory_space<vmem>>, vector<120x128xf32>
    %cst_203 = arith.constant dense<0.000000e+00> : vector<2x128xf32>
    %247 = tpu.matmul %245, %246, %cst_203 {dimension_numbers = #tpu.dot_dimension_numbers<[1], [0], [0], [1], [0, 0, 1, 1], [], []>} : vector<2x120xf32>, vector<120x128xf32>, vector<2x128xf32> -> vector<2x128xf32>
    %c0_204 = arith.constant 0 : index
    %c0_205 = arith.constant 0 : index
    %248 = vector.load %arg11[%c0_204, %c0_205] : memref<1x128xf32, #tpu.memory_space<vmem>>, vector<1x128xf32>
    %249 = vector.broadcast %248 : vector<1x128xf32> to vector<2x128xf32>
    %250 = arith.addf %247, %249 : vector<2x128xf32>
    %c0_206 = arith.constant 0 : index
    %c0_207 = arith.constant 0 : index
    %251 = vector.load %arg12[%c0_206, %c0_207] : memref<2x128xf32, #tpu.memory_space<vmem>>, vector<2x128xf32>
    tpu.vector_store %arg12[%c0_206, %c0_207], %250 {strides = array<i32>} : memref<2x128xf32, #tpu.memory_space<vmem>>, vector<2x128xf32>,
    return
  }
  func.func @transform_0(%arg0: i32) -> (i32, i32) {
    %c0_i32 = arith.constant 0 : i32
    %c0_i32_0 = arith.constant 0 : i32
    return %arg0, %c0_i32 : i32, i32
  }
  func.func @transform_1(%arg0: i32) -> (i32, i32, i32) {
    %c0_i32 = arith.constant 0 : i32
    %c0_i32_0 = arith.constant 0 : i32
    %c0_i32_1 = arith.constant 0 : i32
    %c0_i32_2 = arith.constant 0 : i32
    return %c0_i32, %c0_i32_0, %c0_i32_1 : i32, i32, i32
  }
  func.func @transform_2(%arg0: i32) -> (i32, i32, i32) {
    %c0_i32 = arith.constant 0 : i32
    %c0_i32_0 = arith.constant 0 : i32
    %c0_i32_1 = arith.constant 0 : i32
    %c0_i32_2 = arith.constant 0 : i32
    return %c0_i32, %c0_i32_0, %c0_i32_1 : i32, i32, i32
  }
  func.func @transform_3(%arg0: i32) -> (i32, i32) {
    %c0_i32 = arith.constant 0 : i32
    %c0_i32_0 = arith.constant 0 : i32
    %c0_i32_1 = arith.constant 0 : i32
    return %c0_i32, %c0_i32_0 : i32, i32
  }
  func.func @transform_4(%arg0: i32) -> (i32, i32, i32) {
    %c0_i32 = arith.constant 0 : i32
    %c0_i32_0 = arith.constant 0 : i32
    %c0_i32_1 = arith.constant 0 : i32
    %c0_i32_2 = arith.constant 0 : i32
    return %c0_i32, %c0_i32_0, %c0_i32_1 : i32, i32, i32
  }
  func.func @transform_5(%arg0: i32) -> (i32, i32, i32) {
    %c0_i32 = arith.constant 0 : i32
    %c0_i32_0 = arith.constant 0 : i32
    %c0_i32_1 = arith.constant 0 : i32
    %c0_i32_2 = arith.constant 0 : i32
    return %c0_i32, %c0_i32_0, %c0_i32_1 : i32, i32, i32
  }
  func.func @transform_6(%arg0: i32) -> (i32, i32) {
    %c0_i32 = arith.constant 0 : i32
    %c0_i32_0 = arith.constant 0 : i32
    %c0_i32_1 = arith.constant 0 : i32
    return %c0_i32, %c0_i32_0 : i32, i32
  }
  func.func @transform_7(%arg0: i32) -> (i32, i32, i32) {
    %c0_i32 = arith.constant 0 : i32
    %c0_i32_0 = arith.constant 0 : i32
    %c0_i32_1 = arith.constant 0 : i32
    %c0_i32_2 = arith.constant 0 : i32
    return %c0_i32, %c0_i32_0, %c0_i32_1 : i32, i32, i32
  }
  func.func @transform_8(%arg0: i32) -> (i32, i32) {
    %c0_i32 = arith.constant 0 : i32
    %c0_i32_0 = arith.constant 0 : i32
    %c0_i32_1 = arith.constant 0 : i32
    return %c0_i32, %c0_i32_0 : i32, i32
  }
  func.func @transform_9(%arg0: i32) -> (i32, i32) {
    %c0_i32 = arith.constant 0 : i32
    %c0_i32_0 = arith.constant 0 : i32
    %c0_i32_1 = arith.constant 0 : i32
    return %c0_i32, %c0_i32_0 : i32, i32
  }
  func.func @transform_10(%arg0: i32) -> (i32, i32) {
    %c0_i32 = arith.constant 0 : i32
    %c0_i32_0 = arith.constant 0 : i32
    %c0_i32_1 = arith.constant 0 : i32
    return %c0_i32, %c0_i32_0 : i32, i32
  }
  func.func @transform_11(%arg0: i32) -> (i32, i32) {
    %c0_i32 = arith.constant 0 : i32
    %c0_i32_0 = arith.constant 0 : i32
    return %arg0, %c0_i32 : i32, i32
  }
}

</mosaic_0001>

<llo_original>
// kernel: mini_lenet5_forward.1
$region0: #{mini_lenet5_forward.1}
  #allocation0 [shape = 'u32[]', space=smem, size = 0x4, offset = 0x4, fixed_abs, tag = 'smem constant byte address 0x4 - core index']
  #allocation1 [shape = 'u32[72,128]{1,0:T(1,128)}', space=vmem, size = 0x9000, scoped, tag = 'internal scratch']
  #allocation2 [shape = 'f32[28,84]{1,0:T(8,128)}', space=vmem, size = 0x4000, scoped, tag = 'scratch operand']
  %s0 = inlined_call_operand.vmem [shape: f32[64,32], index: 0, kind: input, shape index: {}]
  %s1 = inlined_call_operand.vmem [shape: f32[5,32,84], index: 1, kind: input, shape index: {}]
  %s2 = inlined_call_operand.vmem [shape: f32[5,32,84], index: 2, kind: input, shape index: {}]
  %s3 = inlined_call_operand.vmem [shape: f32[1,84], index: 3, kind: input, shape index: {}]
  %s4 = inlined_call_operand.vmem [shape: f32[5,84,80], index: 4, kind: input, shape index: {}]
  %s5 = inlined_call_operand.vmem [shape: f32[5,84,80], index: 5, kind: input, shape index: {}]
  %s6 = inlined_call_operand.vmem [shape: f32[1,80], index: 6, kind: input, shape index: {}]
  %s7 = inlined_call_operand.vmem [shape: f32[5,80,120], index: 7, kind: input, shape index: {}]
  %s8 = inlined_call_operand.vmem [shape: f32[1,120], index: 8, kind: input, shape index: {}]
  %s9 = inlined_call_operand.vmem [shape: f32[120,128], index: 9, kind: input, shape index: {}]
  %s10 = inlined_call_operand.vmem [shape: f32[1,128], index: 10, kind: input, shape index: {}]
  %s11 = inlined_call_operand.hbm [shape: f32[2,128], index: 11, kind: output, shape index: {}]
  %s12 = sld [smem:[#allocation0]]
  $region54: #{mini_lenet5_forward.1} parent=0
    _
  %s14 = ssub.s32 1, %s12
  %s15 = scalar_select 0, %s14, %s12
  $region1: #{mini_lenet5_forward.1} parent=0
    #allocation3 [shape = 'u8[1024]{0}', space=vmem, size = 0x400, scoped, tag = 'output window, operand 0, single buffered']
    #allocation4 [shape = 's32[1]{0}', space=sflag, size = 0x4, scoped, tag = 'scoped memory for mini_lenet5_forward.1']
    %16 = vsyncpa [#allocation4], 0
    // Predicated region
    $region2: #{mini_lenet5_forward.1} parent=1 // pred_check
      _
    $region3: #{mini_lenet5_forward.1} parent=1 // pred_check_branch
      %18 = sbr.rel (0) target = $region5
    $region4: #{mini_lenet5_forward.1} parent=1 // pred_region
      _
    $region5: #{mini_lenet5_forward.1} parent=1 // pred_fallthru
      _
    // Predicated region
    $region6: #{mini_lenet5_forward.1} parent=1 // pred_check
      _
    $region7: #{mini_lenet5_forward.1} parent=1 // pred_check_branch
      %20 = sbr.rel (0) target = $region9
    $region8: #{mini_lenet5_forward.1} parent=1 // pred_region
      _
    $region9: #{mini_lenet5_forward.1} parent=1 // pred_fallthru
      _
    // Predicated region
    $region10: #{mini_lenet5_forward.1} parent=1 // pred_check
      _
    $region11: #{mini_lenet5_forward.1} parent=1 // pred_check_branch
      %22 = sbr.rel (0) target = $region13
    $region12: #{mini_lenet5_forward.1} parent=1 // pred_region
      _
    $region13: #{mini_lenet5_forward.1} parent=1 // pred_fallthru
      _
    // Predicated region
    $region14: #{mini_lenet5_forward.1} parent=1 // pred_check
      _
    $region15: #{mini_lenet5_forward.1} parent=1 // pred_check_branch
      %24 = sbr.rel (0) target = $region17
    $region16: #{mini_lenet5_forward.1} parent=1 // pred_region
      _
    $region17: #{mini_lenet5_forward.1} parent=1 // pred_fallthru
      _
    // Predicated region
    $region18: #{mini_lenet5_forward.1} parent=1 // pred_check
      _
    $region19: #{mini_lenet5_forward.1} parent=1 // pred_check_branch
      %26 = sbr.rel (0) target = $region21
    $region20: #{mini_lenet5_forward.1} parent=1 // pred_region
      _
    $region21: #{mini_lenet5_forward.1} parent=1 // pred_fallthru
      _
    // Predicated region
    $region22: #{mini_lenet5_forward.1} parent=1 // pred_check
      _
    $region23: #{mini_lenet5_forward.1} parent=1 // pred_check_branch
      %28 = sbr.rel (0) target = $region25
    $region24: #{mini_lenet5_forward.1} parent=1 // pred_region
      _
    $region25: #{mini_lenet5_forward.1} parent=1 // pred_fallthru
      _
    // Predicated region
    $region26: #{mini_lenet5_forward.1} parent=1 // pred_check
      _
    $region27: #{mini_lenet5_forward.1} parent=1 // pred_check_branch
      %30 = sbr.rel (0) target = $region29
    $region28: #{mini_lenet5_forward.1} parent=1 // pred_region
      _
    $region29: #{mini_lenet5_forward.1} parent=1 // pred_fallthru
      _
    // Predicated region
    $region30: #{mini_lenet5_forward.1} parent=1 // pred_check
      _
    $region31: #{mini_lenet5_forward.1} parent=1 // pred_check_branch
      %32 = sbr.rel (0) target = $region33
    $region32: #{mini_lenet5_forward.1} parent=1 // pred_region
      _
    $region33: #{mini_lenet5_forward.1} parent=1 // pred_fallthru
      _
    // Predicated region
    $region34: #{mini_lenet5_forward.1} parent=1 // pred_check
      _
    $region35: #{mini_lenet5_forward.1} parent=1 // pred_check_branch
      %34 = sbr.rel (0) target = $region37
    $region36: #{mini_lenet5_forward.1} parent=1 // pred_region
      _
    $region37: #{mini_lenet5_forward.1} parent=1 // pred_fallthru
      _
    // Predicated region
    $region38: #{mini_lenet5_forward.1} parent=1 // pred_check
      _
    $region39: #{mini_lenet5_forward.1} parent=1 // pred_check_branch
      %36 = sbr.rel (0) target = $region41
    $region40: #{mini_lenet5_forward.1} parent=1 // pred_region
      _
    $region41: #{mini_lenet5_forward.1} parent=1 // pred_fallthru
      _
    // Predicated region
    $region42: #{mini_lenet5_forward.1} parent=1 // pred_check
      _
    $region43: #{mini_lenet5_forward.1} parent=1 // pred_check_branch
      %38 = sbr.rel (0) target = $region45
    $region44: #{mini_lenet5_forward.1} parent=1 // pred_region
      _
    $region45: #{mini_lenet5_forward.1} parent=1 // pred_fallthru
      _
    %v39 = vld [vmem:[%s0] ss:$2 sm:$0xff]
    %s40 = scalar_lea.vmem %s0, 16
    %v41 = vld [vmem:[%s40] ss:$2 sm:$0x3f]
    %s42 = scalar_lea.vmem %s0, 32
    %v43 = vld [vmem:[%s42] ss:$2 sm:$0xff]
    %s44 = scalar_lea.vmem %s0, 48
    %v45 = vld [vmem:[%s44] ss:$2 sm:$0x3f]
    %vm48 = vcmask 1045504
    %v49 = vrot.slane %v43, 2
    %v50 = vrot.slane %v45, 2
    %v51 = vsel %vm48, %v49, %v50
    %v53 = vsel %vm48, %v41, %v49
    %s54 = scalar_lea.vmem %s0, 1
    %v55 = vld [vmem:[%s54] ss:$2 sm:$0xff]
    %s56 = scalar_lea.vmem %s0, 17
    %v57 = vld [vmem:[%s56] ss:$2 sm:$0x3f]
    %s58 = scalar_lea.vmem %s0, 33
    %v59 = vld [vmem:[%s58] ss:$2 sm:$0xff]
    %s60 = scalar_lea.vmem %s0, 49
    %v61 = vld [vmem:[%s60] ss:$2 sm:$0x3f]
    %v64 = vrot.slane %v59, 2
    %v65 = vrot.slane %v61, 2
    %v66 = vsel %vm48, %v64, %v65
    %v68 = vsel %vm48, %v57, %v64
    %v69 = vld [vmem:[%s1] sm:$0xff]
    %v70 = vld [vmem:[%s1 + $0x8] sm:$0xff]
    %v71 = vld [vmem:[%s1 + $0x10] sm:$0xff]
    %v72 = vld [vmem:[%s1 + $0x18] sm:$0xff]
    %v73 = vld [vmem:[%s2] sm:$0xff]
    %v74 = vld [vmem:[%s2 + $0x8] sm:$0xff]
    %v75 = vld [vmem:[%s2 + $0x10] sm:$0xff]
    %v76 = vld [vmem:[%s2 + $0x18] sm:$0xff]
    %s77 = scalar_lea.vmem %s0, 2
    %v78 = vld [vmem:[%s77] ss:$2 sm:$0xff]
    %s79 = scalar_lea.vmem %s0, 18
    %v80 = vld [vmem:[%s79] ss:$2 sm:$0x3f]
    %s81 = scalar_lea.vmem %s0, 34
    %v82 = vld [vmem:[%s81] ss:$2 sm:$0xff]
    %s83 = scalar_lea.vmem %s0, 50
    %v84 = vld [vmem:[%s83] ss:$2 sm:$0x3f]
    %v87 = vrot.slane %v82, 2
    %v88 = vrot.slane %v84, 2
    %v89 = vsel %vm48, %v87, %v88
    %v91 = vsel %vm48, %v80, %v87
    %s92 = scalar_lea.vmem %s1, 32
    %v93 = vld [vmem:[%s92] sm:$0xff]
    %v94 = vld [vmem:[%s92 + $0x8] sm:$0xff]
    %v95 = vld [vmem:[%s92 + $0x10] sm:$0xff]
    %v96 = vld [vmem:[%s92 + $0x18] sm:$0xff]
    %s97 = scalar_lea.vmem %s2, 32
    %v98 = vld [vmem:[%s97] sm:$0xff]
    %v99 = vld [vmem:[%s97 + $0x8] sm:$0xff]
    %v100 = vld [vmem:[%s97 + $0x10] sm:$0xff]
    %v101 = vld [vmem:[%s97 + $0x18] sm:$0xff]
    %vm102 = vcmask 261120
    %v104 = vsel %vm102, %v55, 0
    %v107 = vsel %vm102, %v68, 0
    %v109 = vsel %vm102, %v66, 0
    %v111 = vsel %vm102, %v65, 0
    %113 = vmatpush.msra.mxu0 0.0
    %114 = vmatpush.msra.mxu0 0.0
    %115 = vmatpush.msra.mxu0 0.0
    %116 = vmatpush.msra.mxu0 0.0
    %117 = vmatpush.msra.mxu0 0.0
    %118 = vmatpush.msra.mxu0 0.0
    %119 = vmatpush.msra.mxu0 0.0
    %120 = vmatpush.msra.mxu0 0.0
    %121 = vmatpush.msra.mxu0 0.0
    %122 = vmatpush.msra.mxu0 0.0
    %123 = vmatpush.msra.mxu0 0.0
    %124 = vmatpush.msra.mxu0 0.0
    %125 = vmatpush.msra.mxu0 %v96
    %126 = vmatpush.msra.mxu0 %v95
    %127 = vmatpush.msra.mxu0 %v94
    %128 = vmatpush.msra.mxu0 %v93
    %129 = vmatmul.f32.gmra.mxu0 %v104
    %v130 = vpop.f32.mrf.mxu0
    %v131 = vadd.f32 0.0, %v130
    %132 = vmatmul.f32.gmra.mxu0 %v107
    %v133 = vpop.f32.mrf.mxu0
    %v134 = vadd.f32 0.0, %v133
    %135 = vmatmul.f32.gmra.mxu0 %v109
    %v136 = vpop.f32.mrf.mxu0
    %v137 = vadd.f32 0.0, %v136
    %138 = vmatmul.f32.gmra.mxu0 %v111
    %v139 = vpop.f32.mrf.mxu0
    %v140 = vadd.f32 0.0, %v139
    %141 = vdwg.mxu0
    %v143 = vsel %vm102, %v39, 0
    %v146 = vsel %vm102, %v53, 0
    %v148 = vsel %vm102, %v51, 0
    %v150 = vsel %vm102, %v50, 0
    %152 = vmatpush.msra.mxu0 0.0
    %153 = vmatpush.msra.mxu0 0.0
    %154 = vmatpush.msra.mxu0 0.0
    %155 = vmatpush.msra.mxu0 0.0
    %156 = vmatpush.msra.mxu0 0.0
    %157 = vmatpush.msra.mxu0 0.0
    %158 = vmatpush.msra.mxu0 0.0
    %159 = vmatpush.msra.mxu0 0.0
    %160 = vmatpush.msra.mxu0 0.0
    %161 = vmatpush.msra.mxu0 0.0
    %162 = vmatpush.msra.mxu0 0.0
    %163 = vmatpush.msra.mxu0 0.0
    %164 = vmatpush.msra.mxu0 %v72
    %165 = vmatpush.msra.mxu0 %v71
    %166 = vmatpush.msra.mxu0 %v70
    %167 = vmatpush.msra.mxu0 %v69
    %168 = vmatmul.f32.gmra.mxu0 %v143
    %v169 = vpop.f32.mrf.mxu0
    %v170 = vadd.f32 %v131, %v169
    %171 = vmatmul.f32.gmra.mxu0 %v146
    %v172 = vpop.f32.mrf.mxu0
    %v173 = vadd.f32 %v134, %v172
    %174 = vmatmul.f32.gmra.mxu0 %v148
    %v175 = vpop.f32.mrf.mxu0
    %v176 = vadd.f32 %v137, %v175
    %177 = vmatmul.f32.gmra.mxu0 %v150
    %v178 = vpop.f32.mrf.mxu0
    %v179 = vadd.f32 %v140, %v178
    %180 = vdwg.mxu0
    %181 = vmatpush.msra.mxu0 0.0
    %182 = vmatpush.msra.mxu0 0.0
    %183 = vmatpush.msra.mxu0 0.0
    %184 = vmatpush.msra.mxu0 0.0
    %185 = vmatpush.msra.mxu0 0.0
    %186 = vmatpush.msra.mxu0 0.0
    %187 = vmatpush.msra.mxu0 0.0
    %188 = vmatpush.msra.mxu0 0.0
    %189 = vmatpush.msra.mxu0 0.0
    %190 = vmatpush.msra.mxu0 0.0
    %191 = vmatpush.msra.mxu0 0.0
    %192 = vmatpush.msra.mxu0 0.0
    %193 = vmatpush.msra.mxu0 %v101
    %194 = vmatpush.msra.mxu0 %v100
    %195 = vmatpush.msra.mxu0 %v99
    %196 = vmatpush.msra.mxu0 %v98
    %197 = vmatmul.f32.gmra.mxu0 %v104
    %v198 = vpop.f32.mrf.mxu0
    %v199 = vadd.f32 0.0, %v198
    %200 = vmatmul.f32.gmra.mxu0 %v107
    %v201 = vpop.f32.mrf.mxu0
    %v202 = vadd.f32 0.0, %v201
    %203 = vmatmul.f32.gmra.mxu0 %v109
    %v204 = vpop.f32.mrf.mxu0
    %v205 = vadd.f32 0.0, %v204
    %206 = vmatmul.f32.gmra.mxu0 %v111
    %v207 = vpop.f32.mrf.mxu0
    %v208 = vadd.f32 0.0, %v207
    %209 = vdwg.mxu0
    %210 = vmatpush.msra.mxu0 0.0
    %211 = vmatpush.msra.mxu0 0.0
    %212 = vmatpush.msra.mxu0 0.0
    %213 = vmatpush.msra.mxu0 0.0
    %214 = vmatpush.msra.mxu0 0.0
    %215 = vmatpush.msra.mxu0 0.0
    %216 = vmatpush.msra.mxu0 0.0
    %217 = vmatpush.msra.mxu0 0.0
    %218 = vmatpush.msra.mxu0 0.0
    %219 = vmatpush.msra.mxu0 0.0
    %220 = vmatpush.msra.mxu0 0.0
    %221 = vmatpush.msra.mxu0 0.0
    %222 = vmatpush.msra.mxu0 %v76
    %223 = vmatpush.msra.mxu0 %v75
    %224 = vmatpush.msra.mxu0 %v74
    %225 = vmatpush.msra.mxu0 %v73
    %226 = vmatmul.f32.gmra.mxu0 %v143
    %v227 = vpop.f32.mrf.mxu0
    %v228 = vadd.f32 %v199, %v227
    %229 = vmatmul.f32.gmra.mxu0 %v146
    %v230 = vpop.f32.mrf.mxu0
    %v231 = vadd.f32 %v202, %v230
    %232 = vmatmul.f32.gmra.mxu0 %v148
    %v233 = vpop.f32.mrf.mxu0
    %v234 = vadd.f32 %v205, %v233
    %235 = vmatmul.f32.gmra.mxu0 %v150
    %v236 = vpop.f32.mrf.mxu0
    %v237 = vadd.f32 %v208, %v236
    %238 = vdwg.mxu0
    %v240 = vsel %vm102, %v78, 0
    %v243 = vsel %vm102, %v91, 0
    %v245 = vsel %vm102, %v89, 0
    %v247 = vsel %vm102, %v88, 0
    %249 = vmatpush.msra.mxu0 0.0
    %250 = vmatpush.msra.mxu0 0.0
    %251 = vmatpush.msra.mxu0 0.0
    %252 = vmatpush.msra.mxu0 0.0
    %253 = vmatpush.msra.mxu0 0.0
    %254 = vmatpush.msra.mxu0 0.0
    %255 = vmatpush.msra.mxu0 0.0
    %256 = vmatpush.msra.mxu0 0.0
    %257 = vmatpush.msra.mxu0 0.0
    %258 = vmatpush.msra.mxu0 0.0
    %259 = vmatpush.msra.mxu0 0.0
    %260 = vmatpush.msra.mxu0 0.0
    %261 = vmatpush.msra.mxu0 %v96
    %262 = vmatpush.msra.mxu0 %v95
    %263 = vmatpush.msra.mxu0 %v94
    %264 = vmatpush.msra.mxu0 %v93
    %265 = vmatmul.f32.gmra.mxu0 %v240
    %v266 = vpop.f32.mrf.mxu0
    %v267 = vadd.f32 0.0, %v266
    %268 = vmatmul.f32.gmra.mxu0 %v243
    %v269 = vpop.f32.mrf.mxu0
    %v270 = vadd.f32 0.0, %v269
    %271 = vmatmul.f32.gmra.mxu0 %v245
    %v272 = vpop.f32.mrf.mxu0
    %v273 = vadd.f32 0.0, %v272
    %274 = vmatmul.f32.gmra.mxu0 %v247
    %v275 = vpop.f32.mrf.mxu0
    %v276 = vadd.f32 0.0, %v275
    %277 = vdwg.mxu0
    %278 = vmatpush.msra.mxu0 0.0
    %279 = vmatpush.msra.mxu0 0.0
    %280 = vmatpush.msra.mxu0 0.0
    %281 = vmatpush.msra.mxu0 0.0
    %282 = vmatpush.msra.mxu0 0.0
    %283 = vmatpush.msra.mxu0 0.0
    %284 = vmatpush.msra.mxu0 0.0
    %285 = vmatpush.msra.mxu0 0.0
    %286 = vmatpush.msra.mxu0 0.0
    %287 = vmatpush.msra.mxu0 0.0
    %288 = vmatpush.msra.mxu0 0.0
    %289 = vmatpush.msra.mxu0 0.0
    %290 = vmatpush.msra.mxu0 %v72
    %291 = vmatpush.msra.mxu0 %v71
    %292 = vmatpush.msra.mxu0 %v70
    %293 = vmatpush.msra.mxu0 %v69
    %294 = vmatmul.f32.gmra.mxu0 %v104
    %v295 = vpop.f32.mrf.mxu0
    %v296 = vadd.f32 %v267, %v295
    %297 = vmatmul.f32.gmra.mxu0 %v107
    %v298 = vpop.f32.mrf.mxu0
    %v299 = vadd.f32 %v270, %v298
    %300 = vmatmul.f32.gmra.mxu0 %v109
    %v301 = vpop.f32.mrf.mxu0
    %v302 = vadd.f32 %v273, %v301
    %303 = vmatmul.f32.gmra.mxu0 %v111
    %v304 = vpop.f32.mrf.mxu0
    %v305 = vadd.f32 %v276, %v304
    %306 = vdwg.mxu0
    %307 = vmatpush.msra.mxu0 0.0
    %308 = vmatpush.msra.mxu0 0.0
    %309 = vmatpush.msra.mxu0 0.0
    %310 = vmatpush.msra.mxu0 0.0
    %311 = vmatpush.msra.mxu0 0.0
    %312 = vmatpush.msra.mxu0 0.0
    %313 = vmatpush.msra.mxu0 0.0
    %314 = vmatpush.msra.mxu0 0.0
    %315 = vmatpush.msra.mxu0 0.0
    %316 = vmatpush.msra.mxu0 0.0
    %317 = vmatpush.msra.mxu0 0.0
    %318 = vmatpush.msra.mxu0 0.0
    %319 = vmatpush.msra.mxu0 %v101
    %320 = vmatpush.msra.mxu0 %v100
    %321 = vmatpush.msra.mxu0 %v99
    %322 = vmatpush.msra.mxu0 %v98
    %323 = vmatmul.f32.gmra.mxu0 %v240
    %v324 = vpop.f32.mrf.mxu0
    %v325 = vadd.f32 0.0, %v324
    %326 = vmatmul.f32.gmra.mxu0 %v243
    %v327 = vpop.f32.mrf.mxu0
    %v328 = vadd.f32 0.0, %v327
    %329 = vmatmul.f32.gmra.mxu0 %v245
    %v330 = vpop.f32.mrf.mxu0
    %v331 = vadd.f32 0.0, %v330
    %332 = vmatmul.f32.gmra.mxu0 %v247
    %v333 = vpop.f32.mrf.mxu0
    %v334 = vadd.f32 0.0, %v333
    %335 = vdwg.mxu0
    %336 = vmatpush.msra.mxu0 0.0
    %337 = vmatpush.msra.mxu0 0.0
    %338 = vmatpush.msra.mxu0 0.0
    %339 = vmatpush.msra.mxu0 0.0
    %340 = vmatpush.msra.mxu0 0.0
    %341 = vmatpush.msra.mxu0 0.0
    %342 = vmatpush.msra.mxu0 0.0
    %343 = vmatpush.msra.mxu0 0.0
    %344 = vmatpush.msra.mxu0 0.0
    %345 = vmatpush.msra.mxu0 0.0
    %346 = vmatpush.msra.mxu0 0.0
    %347 = vmatpush.msra.mxu0 0.0
    %348 = vmatpush.msra.mxu0 %v76
    %349 = vmatpush.msra.mxu0 %v75
    %350 = vmatpush.msra.mxu0 %v74
    %351 = vmatpush.msra.mxu0 %v73
    %352 = vmatmul.f32.gmra.mxu0 %v104
    %v353 = vpop.f32.mrf.mxu0
    %v354 = vadd.f32 %v325, %v353
    %355 = vmatmul.f32.gmra.mxu0 %v107
    %v356 = vpop.f32.mrf.mxu0
    %v357 = vadd.f32 %v328, %v356
    %358 = vmatmul.f32.gmra.mxu0 %v109
    %v359 = vpop.f32.mrf.mxu0
    %v360 = vadd.f32 %v331, %v359
    %361 = vmatmul.f32.gmra.mxu0 %v111
    %v362 = vpop.f32.mrf.mxu0
    %v363 = vadd.f32 %v334, %v362
    %364 = vdwg.mxu0
    %s365 = scalar_lea.vmem %s0, 3
    %v366 = vld [vmem:[%s365] ss:$2 sm:$0xff]
    %s367 = scalar_lea.vmem %s0, 19
    %v368 = vld [vmem:[%s367] ss:$2 sm:$0x3f]
    %s369 = scalar_lea.vmem %s0, 35
    %v370 = vld [vmem:[%s369] ss:$2 sm:$0xff]
    %s371 = scalar_lea.vmem %s0, 51
    %v372 = vld [vmem:[%s371] ss:$2 sm:$0x3f]
    %v375 = vrot.slane %v370, 2
    %v376 = vrot.slane %v372, 2
    %v377 = vsel %vm48, %v375, %v376
    %v379 = vsel %vm48, %v368, %v375
    %s380 = scalar_lea.vmem %s1, 64
    %v381 = vld [vmem:[%s380] sm:$0xff]
    %v382 = vld [vmem:[%s380 + $0x8] sm:$0xff]
    %v383 = vld [vmem:[%s380 + $0x10] sm:$0xff]
    %v384 = vld [vmem:[%s380 + $0x18] sm:$0xff]
    %s385 = scalar_lea.vmem %s2, 64
    %v386 = vld [vmem:[%s385] sm:$0xff]
    %v387 = vld [vmem:[%s385 + $0x8] sm:$0xff]
    %v388 = vld [vmem:[%s385 + $0x10] sm:$0xff]
    %v389 = vld [vmem:[%s385 + $0x18] sm:$0xff]
    %390 = vmatpush.msra.mxu0 0.0
    %391 = vmatpush.msra.mxu0 0.0
    %392 = vmatpush.msra.mxu0 0.0
    %393 = vmatpush.msra.mxu0 0.0
    %394 = vmatpush.msra.mxu0 0.0
    %395 = vmatpush.msra.mxu0 0.0
    %396 = vmatpush.msra.mxu0 0.0
    %397 = vmatpush.msra.mxu0 0.0
    %398 = vmatpush.msra.mxu0 0.0
    %399 = vmatpush.msra.mxu0 0.0
    %400 = vmatpush.msra.mxu0 0.0
    %401 = vmatpush.msra.mxu0 0.0
    %402 = vmatpush.msra.mxu0 %v384
    %403 = vmatpush.msra.mxu0 %v383
    %404 = vmatpush.msra.mxu0 %v382
    %405 = vmatpush.msra.mxu0 %v381
    %406 = vmatmul.f32.gmra.mxu0 %v240
    %v407 = vpop.f32.mrf.mxu0
    %v408 = vadd.f32 0.0, %v407
    %409 = vmatmul.f32.gmra.mxu0 %v243
    %v410 = vpop.f32.mrf.mxu0
    %v411 = vadd.f32 0.0, %v410
    %412 = vmatmul.f32.gmra.mxu0 %v245
    %v413 = vpop.f32.mrf.mxu0
    %v414 = vadd.f32 0.0, %v413
    %415 = vmatmul.f32.gmra.mxu0 %v247
    %v416 = vpop.f32.mrf.mxu0
    %v417 = vadd.f32 0.0, %v416
    %418 = vdwg.mxu0
    %v419 = vadd.f32 %v170, %v408
    %v420 = vadd.f32 %v173, %v411
    %v421 = vadd.f32 %v176, %v414
    %v422 = vadd.f32 %v179, %v417
    %423 = vmatpush.msra.mxu0 0.0
    %424 = vmatpush.msra.mxu0 0.0
    %425 = vmatpush.msra.mxu0 0.0
    %426 = vmatpush.msra.mxu0 0.0
    %427 = vmatpush.msra.mxu0 0.0
    %428 = vmatpush.msra.mxu0 0.0
    %429 = vmatpush.msra.mxu0 0.0
    %430 = vmatpush.msra.mxu0 0.0
    %431 = vmatpush.msra.mxu0 0.0
    %432 = vmatpush.msra.mxu0 0.0
    %433 = vmatpush.msra.mxu0 0.0
    %434 = vmatpush.msra.mxu0 0.0
    %435 = vmatpush.msra.mxu0 %v389
    %436 = vmatpush.msra.mxu0 %v388
    %437 = vmatpush.msra.mxu0 %v387
    %438 = vmatpush.msra.mxu0 %v386
    %439 = vmatmul.f32.gmra.mxu0 %v240
    %v440 = vpop.f32.mrf.mxu0
    %v441 = vadd.f32 0.0, %v440
    %442 = vmatmul.f32.gmra.mxu0 %v243
    %v443 = vpop.f32.mrf.mxu0
    %v444 = vadd.f32 0.0, %v443
    %445 = vmatmul.f32.gmra.mxu0 %v245
    %v446 = vpop.f32.mrf.mxu0
    %v447 = vadd.f32 0.0, %v446
    %448 = vmatmul.f32.gmra.mxu0 %v247
    %v449 = vpop.f32.mrf.mxu0
    %v450 = vadd.f32 0.0, %v449
    %451 = vdwg.mxu0
    %v452 = vadd.f32 %v228, %v441
    %v453 = vadd.f32 %v231, %v444
    %v454 = vadd.f32 %v234, %v447
    %v455 = vadd.f32 %v237, %v450
    %v457 = vsel %vm102, %v366, 0
    %v460 = vsel %vm102, %v379, 0
    %v462 = vsel %vm102, %v377, 0
    %v464 = vsel %vm102, %v376, 0
    %466 = vmatpush.msra.mxu0 0.0
    %467 = vmatpush.msra.mxu0 0.0
    %468 = vmatpush.msra.mxu0 0.0
    %469 = vmatpush.msra.mxu0 0.0
    %470 = vmatpush.msra.mxu0 0.0
    %471 = vmatpush.msra.mxu0 0.0
    %472 = vmatpush.msra.mxu0 0.0
    %473 = vmatpush.msra.mxu0 0.0
    %474 = vmatpush.msra.mxu0 0.0
    %475 = vmatpush.msra.mxu0 0.0
    %476 = vmatpush.msra.mxu0 0.0
    %477 = vmatpush.msra.mxu0 0.0
    %478 = vmatpush.msra.mxu0 %v384
    %479 = vmatpush.msra.mxu0 %v383
    %480 = vmatpush.msra.mxu0 %v382
    %481 = vmatpush.msra.mxu0 %v381
    %482 = vmatmul.f32.gmra.mxu0 %v457
    %v483 = vpop.f32.mrf.mxu0
    %v484 = vadd.f32 0.0, %v483
    %485 = vmatmul.f32.gmra.mxu0 %v460
    %v486 = vpop.f32.mrf.mxu0
    %v487 = vadd.f32 0.0, %v486
    %488 = vmatmul.f32.gmra.mxu0 %v462
    %v489 = vpop.f32.mrf.mxu0
    %v490 = vadd.f32 0.0, %v489
    %491 = vmatmul.f32.gmra.mxu0 %v464
    %v492 = vpop.f32.mrf.mxu0
    %v493 = vadd.f32 0.0, %v492
    %494 = vdwg.mxu0
    %v495 = vadd.f32 %v296, %v484
    %v496 = vadd.f32 %v299, %v487
    %v497 = vadd.f32 %v302, %v490
    %v498 = vadd.f32 %v305, %v493
    %499 = vmatpush.msra.mxu0 0.0
    %500 = vmatpush.msra.mxu0 0.0
    %501 = vmatpush.msra.mxu0 0.0
    %502 = vmatpush.msra.mxu0 0.0
    %503 = vmatpush.msra.mxu0 0.0
    %504 = vmatpush.msra.mxu0 0.0
    %505 = vmatpush.msra.mxu0 0.0
    %506 = vmatpush.msra.mxu0 0.0
    %507 = vmatpush.msra.mxu0 0.0
    %508 = vmatpush.msra.mxu0 0.0
    %509 = vmatpush.msra.mxu0 0.0
    %510 = vmatpush.msra.mxu0 0.0
    %511 = vmatpush.msra.mxu0 %v389
    %512 = vmatpush.msra.mxu0 %v388
    %513 = vmatpush.msra.mxu0 %v387
    %514 = vmatpush.msra.mxu0 %v386
    %515 = vmatmul.f32.gmra.mxu0 %v457
    %v516 = vpop.f32.mrf.mxu0
    %v517 = vadd.f32 0.0, %v516
    %518 = vmatmul.f32.gmra.mxu0 %v460
    %v519 = vpop.f32.mrf.mxu0
    %v520 = vadd.f32 0.0, %v519
    %521 = vmatmul.f32.gmra.mxu0 %v462
    %v522 = vpop.f32.mrf.mxu0
    %v523 = vadd.f32 0.0, %v522
    %524 = vmatmul.f32.gmra.mxu0 %v464
    %v525 = vpop.f32.mrf.mxu0
    %v526 = vadd.f32 0.0, %v525
    %527 = vdwg.mxu0
    %v528 = vadd.f32 %v354, %v517
    %v529 = vadd.f32 %v357, %v520
    %v530 = vadd.f32 %v360, %v523
    %v531 = vadd.f32 %v363, %v526
    %s532 = scalar_lea.vmem %s0, 4
    %v533 = vld [vmem:[%s532] ss:$2 sm:$0xff]
    %s534 = scalar_lea.vmem %s0, 20
    %v535 = vld [vmem:[%s534] ss:$2 sm:$0x3f]
    %s536 = scalar_lea.vmem %s0, 36
    %v537 = vld [vmem:[%s536] ss:$2 sm:$0xff]
    %s538 = scalar_lea.vmem %s0, 52
    %v539 = vld [vmem:[%s538] ss:$2 sm:$0x3f]
    %v542 = vrot.slane %v537, 2
    %v543 = vrot.slane %v539, 2
    %v544 = vsel %vm48, %v542, %v543
    %v546 = vsel %vm48, %v535, %v542
    %s547 = scalar_lea.vmem %s1, 96
    %v548 = vld [vmem:[%s547] sm:$0xff]
    %v549 = vld [vmem:[%s547 + $0x8] sm:$0xff]
    %v550 = vld [vmem:[%s547 + $0x10] sm:$0xff]
    %v551 = vld [vmem:[%s547 + $0x18] sm:$0xff]
    %s552 = scalar_lea.vmem %s2, 96
    %v553 = vld [vmem:[%s552] sm:$0xff]
    %v554 = vld [vmem:[%s552 + $0x8] sm:$0xff]
    %v555 = vld [vmem:[%s552 + $0x10] sm:$0xff]
    %v556 = vld [vmem:[%s552 + $0x18] sm:$0xff]
    %557 = vmatpush.msra.mxu0 0.0
    %558 = vmatpush.msra.mxu0 0.0
    %559 = vmatpush.msra.mxu0 0.0
    %560 = vmatpush.msra.mxu0 0.0
    %561 = vmatpush.msra.mxu0 0.0
    %562 = vmatpush.msra.mxu0 0.0
    %563 = vmatpush.msra.mxu0 0.0
    %564 = vmatpush.msra.mxu0 0.0
    %565 = vmatpush.msra.mxu0 0.0
    %566 = vmatpush.msra.mxu0 0.0
    %567 = vmatpush.msra.mxu0 0.0
    %568 = vmatpush.msra.mxu0 0.0
    %569 = vmatpush.msra.mxu0 %v551
    %570 = vmatpush.msra.mxu0 %v550
    %571 = vmatpush.msra.mxu0 %v549
    %572 = vmatpush.msra.mxu0 %v548
    %573 = vmatmul.f32.gmra.mxu0 %v457
    %v574 = vpop.f32.mrf.mxu0
    %v575 = vadd.f32 0.0, %v574
    %576 = vmatmul.f32.gmra.mxu0 %v460
    %v577 = vpop.f32.mrf.mxu0
    %v578 = vadd.f32 0.0, %v577
    %579 = vmatmul.f32.gmra.mxu0 %v462
    %v580 = vpop.f32.mrf.mxu0
    %v581 = vadd.f32 0.0, %v580
    %582 = vmatmul.f32.gmra.mxu0 %v464
    %v583 = vpop.f32.mrf.mxu0
    %v584 = vadd.f32 0.0, %v583
    %585 = vdwg.mxu0
    %v586 = vadd.f32 %v419, %v575
    %v587 = vadd.f32 %v420, %v578
    %v588 = vadd.f32 %v421, %v581
    %v589 = vadd.f32 %v422, %v584
    %590 = vmatpush.msra.mxu0 0.0
    %591 = vmatpush.msra.mxu0 0.0
    %592 = vmatpush.msra.mxu0 0.0
    %593 = vmatpush.msra.mxu0 0.0
    %594 = vmatpush.msra.mxu0 0.0
    %595 = vmatpush.msra.mxu0 0.0
    %596 = vmatpush.msra.mxu0 0.0
    %597 = vmatpush.msra.mxu0 0.0
    %598 = vmatpush.msra.mxu0 0.0
    %599 = vmatpush.msra.mxu0 0.0
    %600 = vmatpush.msra.mxu0 0.0
    %601 = vmatpush.msra.mxu0 0.0
    %602 = vmatpush.msra.mxu0 %v556
    %603 = vmatpush.msra.mxu0 %v555
    %604 = vmatpush.msra.mxu0 %v554
    %605 = vmatpush.msra.mxu0 %v553
    %606 = vmatmul.f32.gmra.mxu0 %v457
    %v607 = vpop.f32.mrf.mxu0
    %v608 = vadd.f32 0.0, %v607
    %609 = vmatmul.f32.gmra.mxu0 %v460
    %v610 = vpop.f32.mrf.mxu0
    %v611 = vadd.f32 0.0, %v610
    %612 = vmatmul.f32.gmra.mxu0 %v462
    %v613 = vpop.f32.mrf.mxu0
    %v614 = vadd.f32 0.0, %v613
    %615 = vmatmul.f32.gmra.mxu0 %v464
    %v616 = vpop.f32.mrf.mxu0
    %v617 = vadd.f32 0.0, %v616
    %618 = vdwg.mxu0
    %v619 = vadd.f32 %v452, %v608
    %v620 = vadd.f32 %v453, %v611
    %v621 = vadd.f32 %v454, %v614
    %v622 = vadd.f32 %v455, %v617
    %v624 = vsel %vm102, %v533, 0
    %v627 = vsel %vm102, %v546, 0
    %v629 = vsel %vm102, %v544, 0
    %v631 = vsel %vm102, %v543, 0
    %633 = vmatpush.msra.mxu0 0.0
    %634 = vmatpush.msra.mxu0 0.0
    %635 = vmatpush.msra.mxu0 0.0
    %636 = vmatpush.msra.mxu0 0.0
    %637 = vmatpush.msra.mxu0 0.0
    %638 = vmatpush.msra.mxu0 0.0
    %639 = vmatpush.msra.mxu0 0.0
    %640 = vmatpush.msra.mxu0 0.0
    %641 = vmatpush.msra.mxu0 0.0
    %642 = vmatpush.msra.mxu0 0.0
    %643 = vmatpush.msra.mxu0 0.0
    %644 = vmatpush.msra.mxu0 0.0
    %645 = vmatpush.msra.mxu0 %v551
    %646 = vmatpush.msra.mxu0 %v550
    %647 = vmatpush.msra.mxu0 %v549
    %648 = vmatpush.msra.mxu0 %v548
    %649 = vmatmul.f32.gmra.mxu0 %v624
    %v650 = vpop.f32.mrf.mxu0
    %v651 = vadd.f32 0.0, %v650
    %652 = vmatmul.f32.gmra.mxu0 %v627
    %v653 = vpop.f32.mrf.mxu0
    %v654 = vadd.f32 0.0, %v653
    %655 = vmatmul.f32.gmra.mxu0 %v629
    %v656 = vpop.f32.mrf.mxu0
    %v657 = vadd.f32 0.0, %v656
    %658 = vmatmul.f32.gmra.mxu0 %v631
    %v659 = vpop.f32.mrf.mxu0
    %v660 = vadd.f32 0.0, %v659
    %661 = vdwg.mxu0
    %v662 = vadd.f32 %v495, %v651
    %v663 = vadd.f32 %v496, %v654
    %v664 = vadd.f32 %v497, %v657
    %v665 = vadd.f32 %v498, %v660
    %666 = vmatpush.msra.mxu0 0.0
    %667 = vmatpush.msra.mxu0 0.0
    %668 = vmatpush.msra.mxu0 0.0
    %669 = vmatpush.msra.mxu0 0.0
    %670 = vmatpush.msra.mxu0 0.0
    %671 = vmatpush.msra.mxu0 0.0
    %672 = vmatpush.msra.mxu0 0.0
    %673 = vmatpush.msra.mxu0 0.0
    %674 = vmatpush.msra.mxu0 0.0
    %675 = vmatpush.msra.mxu0 0.0
    %676 = vmatpush.msra.mxu0 0.0
    %677 = vmatpush.msra.mxu0 0.0
    %678 = vmatpush.msra.mxu0 %v556
    %679 = vmatpush.msra.mxu0 %v555
    %680 = vmatpush.msra.mxu0 %v554
    %681 = vmatpush.msra.mxu0 %v553
    %682 = vmatmul.f32.gmra.mxu0 %v624
    %v683 = vpop.f32.mrf.mxu0
    %v684 = vadd.f32 0.0, %v683
    %685 = vmatmul.f32.gmra.mxu0 %v627
    %v686 = vpop.f32.mrf.mxu0
    %v687 = vadd.f32 0.0, %v686
    %688 = vmatmul.f32.gmra.mxu0 %v629
    %v689 = vpop.f32.mrf.mxu0
    %v690 = vadd.f32 0.0, %v689
    %691 = vmatmul.f32.gmra.mxu0 %v631
    %v692 = vpop.f32.mrf.mxu0
    %v693 = vadd.f32 0.0, %v692
    %694 = vdwg.mxu0
    %v695 = vadd.f32 %v528, %v684
    %v696 = vadd.f32 %v529, %v687
    %v697 = vadd.f32 %v530, %v690
    %v698 = vadd.f32 %v531, %v693
    %s699 = scalar_lea.vmem %s0, 5
    %v700 = vld [vmem:[%s699] ss:$2 sm:$0xff]
    %s701 = scalar_lea.vmem %s0, 21
    %v702 = vld [vmem:[%s701] ss:$2 sm:$0x3f]
    %s703 = scalar_lea.vmem %s0, 37
    %v704 = vld [vmem:[%s703] ss:$2 sm:$0xff]
    %s705 = scalar_lea.vmem %s0, 53
    %v706 = vld [vmem:[%s705] ss:$2 sm:$0x3f]
    %v709 = vrot.slane %v704, 2
    %v710 = vrot.slane %v706, 2
    %v711 = vsel %vm48, %v709, %v710
    %v713 = vsel %vm48, %v702, %v709
    %s714 = scalar_lea.vmem %s1, 128
    %v715 = vld [vmem:[%s714] sm:$0xff]
    %v716 = vld [vmem:[%s714 + $0x8] sm:$0xff]
    %v717 = vld [vmem:[%s714 + $0x10] sm:$0xff]
    %v718 = vld [vmem:[%s714 + $0x18] sm:$0xff]
    %s719 = scalar_lea.vmem %s2, 128
    %v720 = vld [vmem:[%s719] sm:$0xff]
    %v721 = vld [vmem:[%s719 + $0x8] sm:$0xff]
    %v722 = vld [vmem:[%s719 + $0x10] sm:$0xff]
    %v723 = vld [vmem:[%s719 + $0x18] sm:$0xff]
    %724 = vmatpush.msra.mxu0 0.0
    %725 = vmatpush.msra.mxu0 0.0
    %726 = vmatpush.msra.mxu0 0.0
    %727 = vmatpush.msra.mxu0 0.0
    %728 = vmatpush.msra.mxu0 0.0
    %729 = vmatpush.msra.mxu0 0.0
    %730 = vmatpush.msra.mxu0 0.0
    %731 = vmatpush.msra.mxu0 0.0
    %732 = vmatpush.msra.mxu0 0.0
    %733 = vmatpush.msra.mxu0 0.0
    %734 = vmatpush.msra.mxu0 0.0
    %735 = vmatpush.msra.mxu0 0.0
    %736 = vmatpush.msra.mxu0 %v718
    %737 = vmatpush.msra.mxu0 %v717
    %738 = vmatpush.msra.mxu0 %v716
    %739 = vmatpush.msra.mxu0 %v715
    %740 = vmatmul.f32.gmra.mxu0 %v624
    %v741 = vpop.f32.mrf.mxu0
    %v742 = vadd.f32 0.0, %v741
    %743 = vmatmul.f32.gmra.mxu0 %v627
    %v744 = vpop.f32.mrf.mxu0
    %v745 = vadd.f32 0.0, %v744
    %746 = vmatmul.f32.gmra.mxu0 %v629
    %v747 = vpop.f32.mrf.mxu0
    %v748 = vadd.f32 0.0, %v747
    %749 = vmatmul.f32.gmra.mxu0 %v631
    %v750 = vpop.f32.mrf.mxu0
    %v751 = vadd.f32 0.0, %v750
    %752 = vdwg.mxu0
    %v753 = vadd.f32 %v586, %v742
    %v754 = vadd.f32 %v587, %v745
    %v755 = vadd.f32 %v588, %v748
    %v756 = vadd.f32 %v589, %v751
    %757 = vmatpush.msra.mxu0 0.0
    %758 = vmatpush.msra.mxu0 0.0
    %759 = vmatpush.msra.mxu0 0.0
    %760 = vmatpush.msra.mxu0 0.0
    %761 = vmatpush.msra.mxu0 0.0
    %762 = vmatpush.msra.mxu0 0.0
    %763 = vmatpush.msra.mxu0 0.0
    %764 = vmatpush.msra.mxu0 0.0
    %765 = vmatpush.msra.mxu0 0.0
    %766 = vmatpush.msra.mxu0 0.0
    %767 = vmatpush.msra.mxu0 0.0
    %768 = vmatpush.msra.mxu0 0.0
    %769 = vmatpush.msra.mxu0 %v723
    %770 = vmatpush.msra.mxu0 %v722
    %771 = vmatpush.msra.mxu0 %v721
    %772 = vmatpush.msra.mxu0 %v720
    %773 = vmatmul.f32.gmra.mxu0 %v624
    %v774 = vpop.f32.mrf.mxu0
    %v775 = vadd.f32 0.0, %v774
    %776 = vmatmul.f32.gmra.mxu0 %v627
    %v777 = vpop.f32.mrf.mxu0
    %v778 = vadd.f32 0.0, %v777
    %779 = vmatmul.f32.gmra.mxu0 %v629
    %v780 = vpop.f32.mrf.mxu0
    %v781 = vadd.f32 0.0, %v780
    %782 = vmatmul.f32.gmra.mxu0 %v631
    %v783 = vpop.f32.mrf.mxu0
    %v784 = vadd.f32 0.0, %v783
    %785 = vdwg.mxu0
    %v786 = vadd.f32 %v619, %v775
    %v787 = vadd.f32 %v620, %v778
    %v788 = vadd.f32 %v621, %v781
    %v789 = vadd.f32 %v622, %v784
    %v791 = vsel %vm102, %v700, 0
    %v794 = vsel %vm102, %v713, 0
    %v796 = vsel %vm102, %v711, 0
    %v798 = vsel %vm102, %v710, 0
    %800 = vmatpush.msra.mxu0 0.0
    %801 = vmatpush.msra.mxu0 0.0
    %802 = vmatpush.msra.mxu0 0.0
    %803 = vmatpush.msra.mxu0 0.0
    %804 = vmatpush.msra.mxu0 0.0
    %805 = vmatpush.msra.mxu0 0.0
    %806 = vmatpush.msra.mxu0 0.0
    %807 = vmatpush.msra.mxu0 0.0
    %808 = vmatpush.msra.mxu0 0.0
    %809 = vmatpush.msra.mxu0 0.0
    %810 = vmatpush.msra.mxu0 0.0
    %811 = vmatpush.msra.mxu0 0.0
    %812 = vmatpush.msra.mxu0 %v718
    %813 = vmatpush.msra.mxu0 %v717
    %814 = vmatpush.msra.mxu0 %v716
    %815 = vmatpush.msra.mxu0 %v715
    %816 = vmatmul.f32.gmra.mxu0 %v791
    %v817 = vpop.f32.mrf.mxu0
    %v818 = vadd.f32 0.0, %v817
    %819 = vmatmul.f32.gmra.mxu0 %v794
    %v820 = vpop.f32.mrf.mxu0
    %v821 = vadd.f32 0.0, %v820
    %822 = vmatmul.f32.gmra.mxu0 %v796
    %v823 = vpop.f32.mrf.mxu0
    %v824 = vadd.f32 0.0, %v823
    %825 = vmatmul.f32.gmra.mxu0 %v798
    %v826 = vpop.f32.mrf.mxu0
    %v827 = vadd.f32 0.0, %v826
    %828 = vdwg.mxu0
    %v829 = vadd.f32 %v662, %v818
    %v830 = vadd.f32 %v663, %v821
    %v831 = vadd.f32 %v664, %v824
    %v832 = vadd.f32 %v665, %v827
    %833 = vmatpush.msra.mxu0 0.0
    %834 = vmatpush.msra.mxu0 0.0
    %835 = vmatpush.msra.mxu0 0.0
    %836 = vmatpush.msra.mxu0 0.0
    %837 = vmatpush.msra.mxu0 0.0
    %838 = vmatpush.msra.mxu0 0.0
    %839 = vmatpush.msra.mxu0 0.0
    %840 = vmatpush.msra.mxu0 0.0
    %841 = vmatpush.msra.mxu0 0.0
    %842 = vmatpush.msra.mxu0 0.0
    %843 = vmatpush.msra.mxu0 0.0
    %844 = vmatpush.msra.mxu0 0.0
    %845 = vmatpush.msra.mxu0 %v723
    %846 = vmatpush.msra.mxu0 %v722
    %847 = vmatpush.msra.mxu0 %v721
    %848 = vmatpush.msra.mxu0 %v720
    %849 = vmatmul.f32.gmra.mxu0 %v791
    %v850 = vpop.f32.mrf.mxu0
    %v851 = vadd.f32 0.0, %v850
    %852 = vmatmul.f32.gmra.mxu0 %v794
    %v853 = vpop.f32.mrf.mxu0
    %v854 = vadd.f32 0.0, %v853
    %855 = vmatmul.f32.gmra.mxu0 %v796
    %v856 = vpop.f32.mrf.mxu0
    %v857 = vadd.f32 0.0, %v856
    %858 = vmatmul.f32.gmra.mxu0 %v798
    %v859 = vpop.f32.mrf.mxu0
    %v860 = vadd.f32 0.0, %v859
    %861 = vdwg.mxu0
    %v862 = vadd.f32 %v695, %v851
    %v863 = vadd.f32 %v696, %v854
    %v864 = vadd.f32 %v697, %v857
    %v865 = vadd.f32 %v698, %v860
    %v866 = vmax.f32 %v753, %v786
    %v867 = vmax.f32 %v754, %v787
    %v868 = vmax.f32 %v755, %v788
    %v869 = vmax.f32 %v756, %v789
    %v870 = vmax.f32 %v829, %v862
    %v871 = vmax.f32 %v830, %v863
    %v872 = vmax.f32 %v831, %v864
    %v873 = vmax.f32 %v832, %v865
    %v874 = vmax.f32 %v866, %v870
    %v875 = vmax.f32 %v867, %v871
    %v876 = vmax.f32 %v868, %v872
    %v877 = vmax.f32 %v869, %v873
    %v878 = vld [vmem:[%s3] sm:$0x1]
    %v880 = vperm.slane %v878, 0
    %v882 = vadd.f32 %v874, %v880
    %v883 = vadd.f32 %v875, %v880
    %v884 = vadd.f32 %v876, %v880
    %v885 = vadd.f32 %v877, %v880
    %v886 = vmax.f32 %v882, 0.0
    %v887 = vmax.f32 %v883, 0.0
    %v888 = vmax.f32 %v884, 0.0
    %v889 = vmax.f32 %v885, 0.0
    %vm890 = vcmask 687104
    %891 = vst.msk [vmem:[#allocation2] sm:$0xff] %vm890, %v886
    %892 = vst.msk [vmem:[#allocation2 + $0x8] sm:$0xff] %vm890, %v887
    %893 = vst.msk [vmem:[#allocation2 + $0x10] sm:$0xff] %vm890, %v888
    %vm894 = vcmask 683008
    %895 = vst.msk [vmem:[#allocation2 + $0x18] sm:$0xf] %vm894, %v889
    %v896 = vld [vmem:[#allocation2] ss:$2 sm:$0x1f]
    %s897 = scalar_lea.vmem [#allocation2], 14
    %v898 = vld [vmem:[%s897] ss:$2 sm:$0x1f]
    %v900 = vrot.slane %v898, 3
    %vm902 = vcmask 1044480
    %v903 = vsel %vm902, %v896, %v900
    %s904 = scalar_lea.vmem [#allocation2], 1
    %v905 = vld [vmem:[%s904] ss:$2 sm:$0x1f]
    %s906 = scalar_lea.vmem [#allocation2], 15
    %v907 = vld [vmem:[%s906] ss:$2 sm:$0x1f]
    %v909 = vrot.slane %v907, 3
    %v911 = vsel %vm902, %v905, %v909
    %v912 = vld [vmem:[%s4] sm:$0xff]
    %v913 = vld [vmem:[%s4 + $0x8] sm:$0xff]
    %v914 = vld [vmem:[%s4 + $0x10] sm:$0xff]
    %v915 = vld [vmem:[%s4 + $0x18] sm:$0xff]
    %v916 = vld [vmem:[%s4 + $0x20] sm:$0xff]
    %v917 = vld [vmem:[%s4 + $0x28] sm:$0xff]
    %v918 = vld [vmem:[%s4 + $0x30] sm:$0xff]
    %v919 = vld [vmem:[%s4 + $0x38] sm:$0xff]
    %v920 = vld [vmem:[%s4 + $0x40] sm:$0xff]
    %v921 = vld [vmem:[%s4 + $0x48] sm:$0xff]
    %v922 = vld [vmem:[%s4 + $0x50] sm:$0xf]
    %v923 = vld [vmem:[%s5] sm:$0xff]
    %v924 = vld [vmem:[%s5 + $0x8] sm:$0xff]
    %v925 = vld [vmem:[%s5 + $0x10] sm:$0xff]
    %v926 = vld [vmem:[%s5 + $0x18] sm:$0xff]
    %v927 = vld [vmem:[%s5 + $0x20] sm:$0xff]
    %v928 = vld [vmem:[%s5 + $0x28] sm:$0xff]
    %v929 = vld [vmem:[%s5 + $0x30] sm:$0xff]
    %v930 = vld [vmem:[%s5 + $0x38] sm:$0xff]
    %v931 = vld [vmem:[%s5 + $0x40] sm:$0xff]
    %v932 = vld [vmem:[%s5 + $0x48] sm:$0xff]
    %v933 = vld [vmem:[%s5 + $0x50] sm:$0xf]
    %s934 = scalar_lea.vmem [#allocation2], 2
    %v935 = vld [vmem:[%s934] ss:$2 sm:$0x1f]
    %s936 = scalar_lea.vmem [#allocation2], 16
    %v937 = vld [vmem:[%s936] ss:$2 sm:$0x1f]
    %v939 = vrot.slane %v937, 3
    %v941 = vsel %vm902, %v935, %v939
    %s942 = scalar_lea.vmem %s4, 88
    %v943 = vld [vmem:[%s942] sm:$0xff]
    %v944 = vld [vmem:[%s942 + $0x8] sm:$0xff]
    %v945 = vld [vmem:[%s942 + $0x10] sm:$0xff]
    %v946 = vld [vmem:[%s942 + $0x18] sm:$0xff]
    %v947 = vld [vmem:[%s942 + $0x20] sm:$0xff]
    %v948 = vld [vmem:[%s942 + $0x28] sm:$0xff]
    %v949 = vld [vmem:[%s942 + $0x30] sm:$0xff]
    %v950 = vld [vmem:[%s942 + $0x38] sm:$0xff]
    %v951 = vld [vmem:[%s942 + $0x40] sm:$0xff]
    %v952 = vld [vmem:[%s942 + $0x48] sm:$0xff]
    %v953 = vld [vmem:[%s942 + $0x50] sm:$0xf]
    %s954 = scalar_lea.vmem %s5, 88
    %v955 = vld [vmem:[%s954] sm:$0xff]
    %v956 = vld [vmem:[%s954 + $0x8] sm:$0xff]
    %v957 = vld [vmem:[%s954 + $0x10] sm:$0xff]
    %v958 = vld [vmem:[%s954 + $0x18] sm:$0xff]
    %v959 = vld [vmem:[%s954 + $0x20] sm:$0xff]
    %v960 = vld [vmem:[%s954 + $0x28] sm:$0xff]
    %v961 = vld [vmem:[%s954 + $0x30] sm:$0xff]
    %v962 = vld [vmem:[%s954 + $0x38] sm:$0xff]
    %v963 = vld [vmem:[%s954 + $0x40] sm:$0xff]
    %v964 = vld [vmem:[%s954 + $0x48] sm:$0xff]
    %v965 = vld [vmem:[%s954 + $0x50] sm:$0xf]
    %v967 = vsel %vm890, %v911, 0
    %v969 = vsel %vm890, %v909, 0
    %vm971 = vcmask 1043456
    %v973 = vsel %vm971, %v953, 0
    %975 = vmatpush.msra.mxu0 0.0
    %976 = vmatpush.msra.mxu0 0.0
    %977 = vmatpush.msra.mxu0 0.0
    %978 = vmatpush.msra.mxu0 0.0
    %979 = vmatpush.msra.mxu0 0.0
    %980 = vmatpush.msra.mxu0 %v973
    %981 = vmatpush.msra.mxu0 %v952
    %982 = vmatpush.msra.mxu0 %v951
    %983 = vmatpush.msra.mxu0 %v950
    %984 = vmatpush.msra.mxu0 %v949
    %985 = vmatpush.msra.mxu0 %v948
    %986 = vmatpush.msra.mxu0 %v947
    %987 = vmatpush.msra.mxu0 %v946
    %988 = vmatpush.msra.mxu0 %v945
    %989 = vmatpush.msra.mxu0 %v944
    %990 = vmatpush.msra.mxu0 %v943
    %991 = vmatmul.f32.gmra.mxu0 %v967
    %v992 = vpop.f32.mrf.mxu0
    %v993 = vadd.f32 0.0, %v992
    %994 = vmatmul.f32.gmra.mxu0 %v969
    %v995 = vpop.f32.mrf.mxu0
    %v996 = vadd.f32 0.0, %v995
    %997 = vdwg.mxu0
    %v999 = vsel %vm890, %v903, 0
    %v1001 = vsel %vm890, %v900, 0
    %v1004 = vsel %vm971, %v922, 0
    %1006 = vmatpush.msra.mxu0 0.0
    %1007 = vmatpush.msra.mxu0 0.0
    %1008 = vmatpush.msra.mxu0 0.0
    %1009 = vmatpush.msra.mxu0 0.0
    %1010 = vmatpush.msra.mxu0 0.0
    %1011 = vmatpush.msra.mxu0 %v1004
    %1012 = vmatpush.msra.mxu0 %v921
    %1013 = vmatpush.msra.mxu0 %v920
    %1014 = vmatpush.msra.mxu0 %v919
    %1015 = vmatpush.msra.mxu0 %v918
    %1016 = vmatpush.msra.mxu0 %v917
    %1017 = vmatpush.msra.mxu0 %v916
    %1018 = vmatpush.msra.mxu0 %v915
    %1019 = vmatpush.msra.mxu0 %v914
    %1020 = vmatpush.msra.mxu0 %v913
    %1021 = vmatpush.msra.mxu0 %v912
    %1022 = vmatmul.f32.gmra.mxu0 %v999
    %v1023 = vpop.f32.mrf.mxu0
    %v1024 = vadd.f32 %v993, %v1023
    %1025 = vmatmul.f32.gmra.mxu0 %v1001
    %v1026 = vpop.f32.mrf.mxu0
    %v1027 = vadd.f32 %v996, %v1026
    %1028 = vdwg.mxu0
    %v1030 = vsel %vm971, %v965, 0
    %1032 = vmatpush.msra.mxu0 0.0
    %1033 = vmatpush.msra.mxu0 0.0
    %1034 = vmatpush.msra.mxu0 0.0
    %1035 = vmatpush.msra.mxu0 0.0
    %1036 = vmatpush.msra.mxu0 0.0
    %1037 = vmatpush.msra.mxu0 %v1030
    %1038 = vmatpush.msra.mxu0 %v964
    %1039 = vmatpush.msra.mxu0 %v963
    %1040 = vmatpush.msra.mxu0 %v962
    %1041 = vmatpush.msra.mxu0 %v961
    %1042 = vmatpush.msra.mxu0 %v960
    %1043 = vmatpush.msra.mxu0 %v959
    %1044 = vmatpush.msra.mxu0 %v958
    %1045 = vmatpush.msra.mxu0 %v957
    %1046 = vmatpush.msra.mxu0 %v956
    %1047 = vmatpush.msra.mxu0 %v955
    %1048 = vmatmul.f32.gmra.mxu0 %v967
    %v1049 = vpop.f32.mrf.mxu0
    %v1050 = vadd.f32 0.0, %v1049
    %1051 = vmatmul.f32.gmra.mxu0 %v969
    %v1052 = vpop.f32.mrf.mxu0
    %v1053 = vadd.f32 0.0, %v1052
    %1054 = vdwg.mxu0
    %v1056 = vsel %vm971, %v933, 0
    %1058 = vmatpush.msra.mxu0 0.0
    %1059 = vmatpush.msra.mxu0 0.0
    %1060 = vmatpush.msra.mxu0 0.0
    %1061 = vmatpush.msra.mxu0 0.0
    %1062 = vmatpush.msra.mxu0 0.0
    %1063 = vmatpush.msra.mxu0 %v1056
    %1064 = vmatpush.msra.mxu0 %v932
    %1065 = vmatpush.msra.mxu0 %v931
    %1066 = vmatpush.msra.mxu0 %v930
    %1067 = vmatpush.msra.mxu0 %v929
    %1068 = vmatpush.msra.mxu0 %v928
    %1069 = vmatpush.msra.mxu0 %v927
    %1070 = vmatpush.msra.mxu0 %v926
    %1071 = vmatpush.msra.mxu0 %v925
    %1072 = vmatpush.msra.mxu0 %v924
    %1073 = vmatpush.msra.mxu0 %v923
    %1074 = vmatmul.f32.gmra.mxu0 %v999
    %v1075 = vpop.f32.mrf.mxu0
    %v1076 = vadd.f32 %v1050, %v1075
    %1077 = vmatmul.f32.gmra.mxu0 %v1001
    %v1078 = vpop.f32.mrf.mxu0
    %v1079 = vadd.f32 %v1053, %v1078
    %1080 = vdwg.mxu0
    %v1082 = vsel %vm890, %v941, 0
    %v1084 = vsel %vm890, %v939, 0
    %1086 = vmatpush.msra.mxu0 0.0
    %1087 = vmatpush.msra.mxu0 0.0
    %1088 = vmatpush.msra.mxu0 0.0
    %1089 = vmatpush.msra.mxu0 0.0
    %1090 = vmatpush.msra.mxu0 0.0
    %1091 = vmatpush.msra.mxu0 %v973
    %1092 = vmatpush.msra.mxu0 %v952
    %1093 = vmatpush.msra.mxu0 %v951
    %1094 = vmatpush.msra.mxu0 %v950
    %1095 = vmatpush.msra.mxu0 %v949
    %1096 = vmatpush.msra.mxu0 %v948
    %1097 = vmatpush.msra.mxu0 %v947
    %1098 = vmatpush.msra.mxu0 %v946
    %1099 = vmatpush.msra.mxu0 %v945
    %1100 = vmatpush.msra.mxu0 %v944
    %1101 = vmatpush.msra.mxu0 %v943
    %1102 = vmatmul.f32.gmra.mxu0 %v1082
    %v1103 = vpop.f32.mrf.mxu0
    %v1104 = vadd.f32 0.0, %v1103
    %1105 = vmatmul.f32.gmra.mxu0 %v1084
    %v1106 = vpop.f32.mrf.mxu0
    %v1107 = vadd.f32 0.0, %v1106
    %1108 = vdwg.mxu0
    %1109 = vmatpush.msra.mxu0 0.0
    %1110 = vmatpush.msra.mxu0 0.0
    %1111 = vmatpush.msra.mxu0 0.0
    %1112 = vmatpush.msra.mxu0 0.0
    %1113 = vmatpush.msra.mxu0 0.0
    %1114 = vmatpush.msra.mxu0 %v1004
    %1115 = vmatpush.msra.mxu0 %v921
    %1116 = vmatpush.msra.mxu0 %v920
    %1117 = vmatpush.msra.mxu0 %v919
    %1118 = vmatpush.msra.mxu0 %v918
    %1119 = vmatpush.msra.mxu0 %v917
    %1120 = vmatpush.msra.mxu0 %v916
    %1121 = vmatpush.msra.mxu0 %v915
    %1122 = vmatpush.msra.mxu0 %v914
    %1123 = vmatpush.msra.mxu0 %v913
    %1124 = vmatpush.msra.mxu0 %v912
    %1125 = vmatmul.f32.gmra.mxu0 %v967
    %v1126 = vpop.f32.mrf.mxu0
    %v1127 = vadd.f32 %v1104, %v1126
    %1128 = vmatmul.f32.gmra.mxu0 %v969
    %v1129 = vpop.f32.mrf.mxu0
    %v1130 = vadd.f32 %v1107, %v1129
    %1131 = vdwg.mxu0
    %1132 = vmatpush.msra.mxu0 0.0
    %1133 = vmatpush.msra.mxu0 0.0
    %1134 = vmatpush.msra.mxu0 0.0
    %1135 = vmatpush.msra.mxu0 0.0
    %1136 = vmatpush.msra.mxu0 0.0
    %1137 = vmatpush.msra.mxu0 %v1030
    %1138 = vmatpush.msra.mxu0 %v964
    %1139 = vmatpush.msra.mxu0 %v963
    %1140 = vmatpush.msra.mxu0 %v962
    %1141 = vmatpush.msra.mxu0 %v961
    %1142 = vmatpush.msra.mxu0 %v960
    %1143 = vmatpush.msra.mxu0 %v959
    %1144 = vmatpush.msra.mxu0 %v958
    %1145 = vmatpush.msra.mxu0 %v957
    %1146 = vmatpush.msra.mxu0 %v956
    %1147 = vmatpush.msra.mxu0 %v955
    %1148 = vmatmul.f32.gmra.mxu0 %v1082
    %v1149 = vpop.f32.mrf.mxu0
    %v1150 = vadd.f32 0.0, %v1149
    %1151 = vmatmul.f32.gmra.mxu0 %v1084
    %v1152 = vpop.f32.mrf.mxu0
    %v1153 = vadd.f32 0.0, %v1152
    %1154 = vdwg.mxu0
    %1155 = vmatpush.msra.mxu0 0.0
    %1156 = vmatpush.msra.mxu0 0.0
    %1157 = vmatpush.msra.mxu0 0.0
    %1158 = vmatpush.msra.mxu0 0.0
    %1159 = vmatpush.msra.mxu0 0.0
    %1160 = vmatpush.msra.mxu0 %v1056
    %1161 = vmatpush.msra.mxu0 %v932
    %1162 = vmatpush.msra.mxu0 %v931
    %1163 = vmatpush.msra.mxu0 %v930
    %1164 = vmatpush.msra.mxu0 %v929
    %1165 = vmatpush.msra.mxu0 %v928
    %1166 = vmatpush.msra.mxu0 %v927
    %1167 = vmatpush.msra.mxu0 %v926
    %1168 = vmatpush.msra.mxu0 %v925
    %1169 = vmatpush.msra.mxu0 %v924
    %1170 = vmatpush.msra.mxu0 %v923
    %1171 = vmatmul.f32.gmra.mxu0 %v967
    %v1172 = vpop.f32.mrf.mxu0
    %v1173 = vadd.f32 %v1150, %v1172
    %1174 = vmatmul.f32.gmra.mxu0 %v969
    %v1175 = vpop.f32.mrf.mxu0
    %v1176 = vadd.f32 %v1153, %v1175
    %1177 = vdwg.mxu0
    %s1178 = scalar_lea.vmem [#allocation2], 3
    %v1179 = vld [vmem:[%s1178] ss:$2 sm:$0x1f]
    %s1180 = scalar_lea.vmem [#allocation2], 17
    %v1181 = vld [vmem:[%s1180] ss:$2 sm:$0x1f]
    %v1183 = vrot.slane %v1181, 3
    %v1185 = vsel %vm902, %v1179, %v1183
    %s1186 = scalar_lea.vmem %s4, 176
    %v1187 = vld [vmem:[%s1186] sm:$0xff]
    %v1188 = vld [vmem:[%s1186 + $0x8] sm:$0xff]
    %v1189 = vld [vmem:[%s1186 + $0x10] sm:$0xff]
    %v1190 = vld [vmem:[%s1186 + $0x18] sm:$0xff]
    %v1191 = vld [vmem:[%s1186 + $0x20] sm:$0xff]
    %v1192 = vld [vmem:[%s1186 + $0x28] sm:$0xff]
    %v1193 = vld [vmem:[%s1186 + $0x30] sm:$0xff]
    %v1194 = vld [vmem:[%s1186 + $0x38] sm:$0xff]
    %v1195 = vld [vmem:[%s1186 + $0x40] sm:$0xff]
    %v1196 = vld [vmem:[%s1186 + $0x48] sm:$0xff]
    %v1197 = vld [vmem:[%s1186 + $0x50] sm:$0xf]
    %s1198 = scalar_lea.vmem %s5, 176
    %v1199 = vld [vmem:[%s1198] sm:$0xff]
    %v1200 = vld [vmem:[%s1198 + $0x8] sm:$0xff]
    %v1201 = vld [vmem:[%s1198 + $0x10] sm:$0xff]
    %v1202 = vld [vmem:[%s1198 + $0x18] sm:$0xff]
    %v1203 = vld [vmem:[%s1198 + $0x20] sm:$0xff]
    %v1204 = vld [vmem:[%s1198 + $0x28] sm:$0xff]
    %v1205 = vld [vmem:[%s1198 + $0x30] sm:$0xff]
    %v1206 = vld [vmem:[%s1198 + $0x38] sm:$0xff]
    %v1207 = vld [vmem:[%s1198 + $0x40] sm:$0xff]
    %v1208 = vld [vmem:[%s1198 + $0x48] sm:$0xff]
    %v1209 = vld [vmem:[%s1198 + $0x50] sm:$0xf]
    %v1211 = vsel %vm971, %v1197, 0
    %1213 = vmatpush.msra.mxu0 0.0
    %1214 = vmatpush.msra.mxu0 0.0
    %1215 = vmatpush.msra.mxu0 0.0
    %1216 = vmatpush.msra.mxu0 0.0
    %1217 = vmatpush.msra.mxu0 0.0
    %1218 = vmatpush.msra.mxu0 %v1211
    %1219 = vmatpush.msra.mxu0 %v1196
    %1220 = vmatpush.msra.mxu0 %v1195
    %1221 = vmatpush.msra.mxu0 %v1194
    %1222 = vmatpush.msra.mxu0 %v1193
    %1223 = vmatpush.msra.mxu0 %v1192
    %1224 = vmatpush.msra.mxu0 %v1191
    %1225 = vmatpush.msra.mxu0 %v1190
    %1226 = vmatpush.msra.mxu0 %v1189
    %1227 = vmatpush.msra.mxu0 %v1188
    %1228 = vmatpush.msra.mxu0 %v1187
    %1229 = vmatmul.f32.gmra.mxu0 %v1082
    %v1230 = vpop.f32.mrf.mxu0
    %v1231 = vadd.f32 0.0, %v1230
    %1232 = vmatmul.f32.gmra.mxu0 %v1084
    %v1233 = vpop.f32.mrf.mxu0
    %v1234 = vadd.f32 0.0, %v1233
    %1235 = vdwg.mxu0
    %v1236 = vadd.f32 %v1024, %v1231
    %v1237 = vadd.f32 %v1027, %v1234
    %v1239 = vsel %vm971, %v1209, 0
    %1241 = vmatpush.msra.mxu0 0.0
    %1242 = vmatpush.msra.mxu0 0.0
    %1243 = vmatpush.msra.mxu0 0.0
    %1244 = vmatpush.msra.mxu0 0.0
    %1245 = vmatpush.msra.mxu0 0.0
    %1246 = vmatpush.msra.mxu0 %v1239
    %1247 = vmatpush.msra.mxu0 %v1208
    %1248 = vmatpush.msra.mxu0 %v1207
    %1249 = vmatpush.msra.mxu0 %v1206
    %1250 = vmatpush.msra.mxu0 %v1205
    %1251 = vmatpush.msra.mxu0 %v1204
    %1252 = vmatpush.msra.mxu0 %v1203
    %1253 = vmatpush.msra.mxu0 %v1202
    %1254 = vmatpush.msra.mxu0 %v1201
    %1255 = vmatpush.msra.mxu0 %v1200
    %1256 = vmatpush.msra.mxu0 %v1199
    %1257 = vmatmul.f32.gmra.mxu0 %v1082
    %v1258 = vpop.f32.mrf.mxu0
    %v1259 = vadd.f32 0.0, %v1258
    %1260 = vmatmul.f32.gmra.mxu0 %v1084
    %v1261 = vpop.f32.mrf.mxu0
    %v1262 = vadd.f32 0.0, %v1261
    %1263 = vdwg.mxu0
    %v1264 = vadd.f32 %v1076, %v1259
    %v1265 = vadd.f32 %v1079, %v1262
    %v1267 = vsel %vm890, %v1185, 0
    %v1269 = vsel %vm890, %v1183, 0
    %1271 = vmatpush.msra.mxu0 0.0
    %1272 = vmatpush.msra.mxu0 0.0
    %1273 = vmatpush.msra.mxu0 0.0
    %1274 = vmatpush.msra.mxu0 0.0
    %1275 = vmatpush.msra.mxu0 0.0
    %1276 = vmatpush.msra.mxu0 %v1211
    %1277 = vmatpush.msra.mxu0 %v1196
    %1278 = vmatpush.msra.mxu0 %v1195
    %1279 = vmatpush.msra.mxu0 %v1194
    %1280 = vmatpush.msra.mxu0 %v1193
    %1281 = vmatpush.msra.mxu0 %v1192
    %1282 = vmatpush.msra.mxu0 %v1191
    %1283 = vmatpush.msra.mxu0 %v1190
    %1284 = vmatpush.msra.mxu0 %v1189
    %1285 = vmatpush.msra.mxu0 %v1188
    %1286 = vmatpush.msra.mxu0 %v1187
    %1287 = vmatmul.f32.gmra.mxu0 %v1267
    %v1288 = vpop.f32.mrf.mxu0
    %v1289 = vadd.f32 0.0, %v1288
    %1290 = vmatmul.f32.gmra.mxu0 %v1269
    %v1291 = vpop.f32.mrf.mxu0
    %v1292 = vadd.f32 0.0, %v1291
    %1293 = vdwg.mxu0
    %v1294 = vadd.f32 %v1127, %v1289
    %v1295 = vadd.f32 %v1130, %v1292
    %1296 = vmatpush.msra.mxu0 0.0
    %1297 = vmatpush.msra.mxu0 0.0
    %1298 = vmatpush.msra.mxu0 0.0
    %1299 = vmatpush.msra.mxu0 0.0
    %1300 = vmatpush.msra.mxu0 0.0
    %1301 = vmatpush.msra.mxu0 %v1239
    %1302 = vmatpush.msra.mxu0 %v1208
    %1303 = vmatpush.msra.mxu0 %v1207
    %1304 = vmatpush.msra.mxu0 %v1206
    %1305 = vmatpush.msra.mxu0 %v1205
    %1306 = vmatpush.msra.mxu0 %v1204
    %1307 = vmatpush.msra.mxu0 %v1203
    %1308 = vmatpush.msra.mxu0 %v1202
    %1309 = vmatpush.msra.mxu0 %v1201
    %1310 = vmatpush.msra.mxu0 %v1200
    %1311 = vmatpush.msra.mxu0 %v1199
    %1312 = vmatmul.f32.gmra.mxu0 %v1267
    %v1313 = vpop.f32.mrf.mxu0
    %v1314 = vadd.f32 0.0, %v1313
    %1315 = vmatmul.f32.gmra.mxu0 %v1269
    %v1316 = vpop.f32.mrf.mxu0
    %v1317 = vadd.f32 0.0, %v1316
    %1318 = vdwg.mxu0
    %v1319 = vadd.f32 %v1173, %v1314
    %v1320 = vadd.f32 %v1176, %v1317
    %s1321 = scalar_lea.vmem [#allocation2], 4
    %v1322 = vld [vmem:[%s1321] ss:$2 sm:$0x1f]
    %s1323 = scalar_lea.vmem [#allocation2], 18
    %v1324 = vld [vmem:[%s1323] ss:$2 sm:$0x1f]
    %v1326 = vrot.slane %v1324, 3
    %v1328 = vsel %vm902, %v1322, %v1326
    %s1329 = scalar_lea.vmem %s4, 264
    %v1330 = vld [vmem:[%s1329] sm:$0xff]
    %v1331 = vld [vmem:[%s1329 + $0x8] sm:$0xff]
    %v1332 = vld [vmem:[%s1329 + $0x10] sm:$0xff]
    %v1333 = vld [vmem:[%s1329 + $0x18] sm:$0xff]
    %v1334 = vld [vmem:[%s1329 + $0x20] sm:$0xff]
    %v1335 = vld [vmem:[%s1329 + $0x28] sm:$0xff]
    %v1336 = vld [vmem:[%s1329 + $0x30] sm:$0xff]
    %v1337 = vld [vmem:[%s1329 + $0x38] sm:$0xff]
    %v1338 = vld [vmem:[%s1329 + $0x40] sm:$0xff]
    %v1339 = vld [vmem:[%s1329 + $0x48] sm:$0xff]
    %v1340 = vld [vmem:[%s1329 + $0x50] sm:$0xf]
    %s1341 = scalar_lea.vmem %s5, 264
    %v1342 = vld [vmem:[%s1341] sm:$0xff]
    %v1343 = vld [vmem:[%s1341 + $0x8] sm:$0xff]
    %v1344 = vld [vmem:[%s1341 + $0x10] sm:$0xff]
    %v1345 = vld [vmem:[%s1341 + $0x18] sm:$0xff]
    %v1346 = vld [vmem:[%s1341 + $0x20] sm:$0xff]
    %v1347 = vld [vmem:[%s1341 + $0x28] sm:$0xff]
    %v1348 = vld [vmem:[%s1341 + $0x30] sm:$0xff]
    %v1349 = vld [vmem:[%s1341 + $0x38] sm:$0xff]
    %v1350 = vld [vmem:[%s1341 + $0x40] sm:$0xff]
    %v1351 = vld [vmem:[%s1341 + $0x48] sm:$0xff]
    %v1352 = vld [vmem:[%s1341 + $0x50] sm:$0xf]
    %v1354 = vsel %vm971, %v1340, 0
    %1356 = vmatpush.msra.mxu0 0.0
    %1357 = vmatpush.msra.mxu0 0.0
    %1358 = vmatpush.msra.mxu0 0.0
    %1359 = vmatpush.msra.mxu0 0.0
    %1360 = vmatpush.msra.mxu0 0.0
    %1361 = vmatpush.msra.mxu0 %v1354
    %1362 = vmatpush.msra.mxu0 %v1339
    %1363 = vmatpush.msra.mxu0 %v1338
    %1364 = vmatpush.msra.mxu0 %v1337
    %1365 = vmatpush.msra.mxu0 %v1336
    %1366 = vmatpush.msra.mxu0 %v1335
    %1367 = vmatpush.msra.mxu0 %v1334
    %1368 = vmatpush.msra.mxu0 %v1333
    %1369 = vmatpush.msra.mxu0 %v1332
    %1370 = vmatpush.msra.mxu0 %v1331
    %1371 = vmatpush.msra.mxu0 %v1330
    %1372 = vmatmul.f32.gmra.mxu0 %v1267
    %v1373 = vpop.f32.mrf.mxu0
    %v1374 = vadd.f32 0.0, %v1373
    %1375 = vmatmul.f32.gmra.mxu0 %v1269
    %v1376 = vpop.f32.mrf.mxu0
    %v1377 = vadd.f32 0.0, %v1376
    %1378 = vdwg.mxu0
    %v1379 = vadd.f32 %v1236, %v1374
    %v1380 = vadd.f32 %v1237, %v1377
    %v1382 = vsel %vm971, %v1352, 0
    %1384 = vmatpush.msra.mxu0 0.0
    %1385 = vmatpush.msra.mxu0 0.0
    %1386 = vmatpush.msra.mxu0 0.0
    %1387 = vmatpush.msra.mxu0 0.0
    %1388 = vmatpush.msra.mxu0 0.0
    %1389 = vmatpush.msra.mxu0 %v1382
    %1390 = vmatpush.msra.mxu0 %v1351
    %1391 = vmatpush.msra.mxu0 %v1350
    %1392 = vmatpush.msra.mxu0 %v1349
    %1393 = vmatpush.msra.mxu0 %v1348
    %1394 = vmatpush.msra.mxu0 %v1347
    %1395 = vmatpush.msra.mxu0 %v1346
    %1396 = vmatpush.msra.mxu0 %v1345
    %1397 = vmatpush.msra.mxu0 %v1344
    %1398 = vmatpush.msra.mxu0 %v1343
    %1399 = vmatpush.msra.mxu0 %v1342
    %1400 = vmatmul.f32.gmra.mxu0 %v1267
    %v1401 = vpop.f32.mrf.mxu0
    %v1402 = vadd.f32 0.0, %v1401
    %1403 = vmatmul.f32.gmra.mxu0 %v1269
    %v1404 = vpop.f32.mrf.mxu0
    %v1405 = vadd.f32 0.0, %v1404
    %1406 = vdwg.mxu0
    %v1407 = vadd.f32 %v1264, %v1402
    %v1408 = vadd.f32 %v1265, %v1405
    %v1410 = vsel %vm890, %v1328, 0
    %v1412 = vsel %vm890, %v1326, 0
    %1414 = vmatpush.msra.mxu0 0.0
    %1415 = vmatpush.msra.mxu0 0.0
    %1416 = vmatpush.msra.mxu0 0.0
    %1417 = vmatpush.msra.mxu0 0.0
    %1418 = vmatpush.msra.mxu0 0.0
    %1419 = vmatpush.msra.mxu0 %v1354
    %1420 = vmatpush.msra.mxu0 %v1339
    %1421 = vmatpush.msra.mxu0 %v1338
    %1422 = vmatpush.msra.mxu0 %v1337
    %1423 = vmatpush.msra.mxu0 %v1336
    %1424 = vmatpush.msra.mxu0 %v1335
    %1425 = vmatpush.msra.mxu0 %v1334
    %1426 = vmatpush.msra.mxu0 %v1333
    %1427 = vmatpush.msra.mxu0 %v1332
    %1428 = vmatpush.msra.mxu0 %v1331
    %1429 = vmatpush.msra.mxu0 %v1330
    %1430 = vmatmul.f32.gmra.mxu0 %v1410
    %v1431 = vpop.f32.mrf.mxu0
    %v1432 = vadd.f32 0.0, %v1431
    %1433 = vmatmul.f32.gmra.mxu0 %v1412
    %v1434 = vpop.f32.mrf.mxu0
    %v1435 = vadd.f32 0.0, %v1434
    %1436 = vdwg.mxu0
    %v1437 = vadd.f32 %v1294, %v1432
    %v1438 = vadd.f32 %v1295, %v1435
    %1439 = vmatpush.msra.mxu0 0.0
    %1440 = vmatpush.msra.mxu0 0.0
    %1441 = vmatpush.msra.mxu0 0.0
    %1442 = vmatpush.msra.mxu0 0.0
    %1443 = vmatpush.msra.mxu0 0.0
    %1444 = vmatpush.msra.mxu0 %v1382
    %1445 = vmatpush.msra.mxu0 %v1351
    %1446 = vmatpush.msra.mxu0 %v1350
    %1447 = vmatpush.msra.mxu0 %v1349
    %1448 = vmatpush.msra.mxu0 %v1348
    %1449 = vmatpush.msra.mxu0 %v1347
    %1450 = vmatpush.msra.mxu0 %v1346
    %1451 = vmatpush.msra.mxu0 %v1345
    %1452 = vmatpush.msra.mxu0 %v1344
    %1453 = vmatpush.msra.mxu0 %v1343
    %1454 = vmatpush.msra.mxu0 %v1342
    %1455 = vmatmul.f32.gmra.mxu0 %v1410
    %v1456 = vpop.f32.mrf.mxu0
    %v1457 = vadd.f32 0.0, %v1456
    %1458 = vmatmul.f32.gmra.mxu0 %v1412
    %v1459 = vpop.f32.mrf.mxu0
    %v1460 = vadd.f32 0.0, %v1459
    %1461 = vdwg.mxu0
    %v1462 = vadd.f32 %v1319, %v1457
    %v1463 = vadd.f32 %v1320, %v1460
    %s1464 = scalar_lea.vmem [#allocation2], 5
    %v1465 = vld [vmem:[%s1464] ss:$2 sm:$0x1f]
    %s1466 = scalar_lea.vmem [#allocation2], 19
    %v1467 = vld [vmem:[%s1466] ss:$2 sm:$0x1f]
    %v1469 = vrot.slane %v1467, 3
    %v1471 = vsel %vm902, %v1465, %v1469
    %s1472 = scalar_lea.vmem %s4, 352
    %v1473 = vld [vmem:[%s1472] sm:$0xff]
    %v1474 = vld [vmem:[%s1472 + $0x8] sm:$0xff]
    %v1475 = vld [vmem:[%s1472 + $0x10] sm:$0xff]
    %v1476 = vld [vmem:[%s1472 + $0x18] sm:$0xff]
    %v1477 = vld [vmem:[%s1472 + $0x20] sm:$0xff]
    %v1478 = vld [vmem:[%s1472 + $0x28] sm:$0xff]
    %v1479 = vld [vmem:[%s1472 + $0x30] sm:$0xff]
    %v1480 = vld [vmem:[%s1472 + $0x38] sm:$0xff]
    %v1481 = vld [vmem:[%s1472 + $0x40] sm:$0xff]
    %v1482 = vld [vmem:[%s1472 + $0x48] sm:$0xff]
    %v1483 = vld [vmem:[%s1472 + $0x50] sm:$0xf]
    %s1484 = scalar_lea.vmem %s5, 352
    %v1485 = vld [vmem:[%s1484] sm:$0xff]
    %v1486 = vld [vmem:[%s1484 + $0x8] sm:$0xff]
    %v1487 = vld [vmem:[%s1484 + $0x10] sm:$0xff]
    %v1488 = vld [vmem:[%s1484 + $0x18] sm:$0xff]
    %v1489 = vld [vmem:[%s1484 + $0x20] sm:$0xff]
    %v1490 = vld [vmem:[%s1484 + $0x28] sm:$0xff]
    %v1491 = vld [vmem:[%s1484 + $0x30] sm:$0xff]
    %v1492 = vld [vmem:[%s1484 + $0x38] sm:$0xff]
    %v1493 = vld [vmem:[%s1484 + $0x40] sm:$0xff]
    %v1494 = vld [vmem:[%s1484 + $0x48] sm:$0xff]
    %v1495 = vld [vmem:[%s1484 + $0x50] sm:$0xf]
    %v1497 = vsel %vm971, %v1483, 0
    %1499 = vmatpush.msra.mxu0 0.0
    %1500 = vmatpush.msra.mxu0 0.0
    %1501 = vmatpush.msra.mxu0 0.0
    %1502 = vmatpush.msra.mxu0 0.0
    %1503 = vmatpush.msra.mxu0 0.0
    %1504 = vmatpush.msra.mxu0 %v1497
    %1505 = vmatpush.msra.mxu0 %v1482
    %1506 = vmatpush.msra.mxu0 %v1481
    %1507 = vmatpush.msra.mxu0 %v1480
    %1508 = vmatpush.msra.mxu0 %v1479
    %1509 = vmatpush.msra.mxu0 %v1478
    %1510 = vmatpush.msra.mxu0 %v1477
    %1511 = vmatpush.msra.mxu0 %v1476
    %1512 = vmatpush.msra.mxu0 %v1475
    %1513 = vmatpush.msra.mxu0 %v1474
    %1514 = vmatpush.msra.mxu0 %v1473
    %1515 = vmatmul.f32.gmra.mxu0 %v1410
    %v1516 = vpop.f32.mrf.mxu0
    %v1517 = vadd.f32 0.0, %v1516
    %1518 = vmatmul.f32.gmra.mxu0 %v1412
    %v1519 = vpop.f32.mrf.mxu0
    %v1520 = vadd.f32 0.0, %v1519
    %1521 = vdwg.mxu0
    %v1522 = vadd.f32 %v1379, %v1517
    %v1523 = vadd.f32 %v1380, %v1520
    %v1525 = vsel %vm971, %v1495, 0
    %1527 = vmatpush.msra.mxu0 0.0
    %1528 = vmatpush.msra.mxu0 0.0
    %1529 = vmatpush.msra.mxu0 0.0
    %1530 = vmatpush.msra.mxu0 0.0
    %1531 = vmatpush.msra.mxu0 0.0
    %1532 = vmatpush.msra.mxu0 %v1525
    %1533 = vmatpush.msra.mxu0 %v1494
    %1534 = vmatpush.msra.mxu0 %v1493
    %1535 = vmatpush.msra.mxu0 %v1492
    %1536 = vmatpush.msra.mxu0 %v1491
    %1537 = vmatpush.msra.mxu0 %v1490
    %1538 = vmatpush.msra.mxu0 %v1489
    %1539 = vmatpush.msra.mxu0 %v1488
    %1540 = vmatpush.msra.mxu0 %v1487
    %1541 = vmatpush.msra.mxu0 %v1486
    %1542 = vmatpush.msra.mxu0 %v1485
    %1543 = vmatmul.f32.gmra.mxu0 %v1410
    %v1544 = vpop.f32.mrf.mxu0
    %v1545 = vadd.f32 0.0, %v1544
    %1546 = vmatmul.f32.gmra.mxu0 %v1412
    %v1547 = vpop.f32.mrf.mxu0
    %v1548 = vadd.f32 0.0, %v1547
    %1549 = vdwg.mxu0
    %v1550 = vadd.f32 %v1407, %v1545
    %v1551 = vadd.f32 %v1408, %v1548
    %v1553 = vsel %vm890, %v1471, 0
    %v1555 = vsel %vm890, %v1469, 0
    %1557 = vmatpush.msra.mxu0 0.0
    %1558 = vmatpush.msra.mxu0 0.0
    %1559 = vmatpush.msra.mxu0 0.0
    %1560 = vmatpush.msra.mxu0 0.0
    %1561 = vmatpush.msra.mxu0 0.0
    %1562 = vmatpush.msra.mxu0 %v1497
    %1563 = vmatpush.msra.mxu0 %v1482
    %1564 = vmatpush.msra.mxu0 %v1481
    %1565 = vmatpush.msra.mxu0 %v1480
    %1566 = vmatpush.msra.mxu0 %v1479
    %1567 = vmatpush.msra.mxu0 %v1478
    %1568 = vmatpush.msra.mxu0 %v1477
    %1569 = vmatpush.msra.mxu0 %v1476
    %1570 = vmatpush.msra.mxu0 %v1475
    %1571 = vmatpush.msra.mxu0 %v1474
    %1572 = vmatpush.msra.mxu0 %v1473
    %1573 = vmatmul.f32.gmra.mxu0 %v1553
    %v1574 = vpop.f32.mrf.mxu0
    %v1575 = vadd.f32 0.0, %v1574
    %1576 = vmatmul.f32.gmra.mxu0 %v1555
    %v1577 = vpop.f32.mrf.mxu0
    %v1578 = vadd.f32 0.0, %v1577
    %1579 = vdwg.mxu0
    %v1580 = vadd.f32 %v1437, %v1575
    %v1581 = vadd.f32 %v1438, %v1578
    %1582 = vmatpush.msra.mxu0 0.0
    %1583 = vmatpush.msra.mxu0 0.0
    %1584 = vmatpush.msra.mxu0 0.0
    %1585 = vmatpush.msra.mxu0 0.0
    %1586 = vmatpush.msra.mxu0 0.0
    %1587 = vmatpush.msra.mxu0 %v1525
    %1588 = vmatpush.msra.mxu0 %v1494
    %1589 = vmatpush.msra.mxu0 %v1493
    %1590 = vmatpush.msra.mxu0 %v1492
    %1591 = vmatpush.msra.mxu0 %v1491
    %1592 = vmatpush.msra.mxu0 %v1490
    %1593 = vmatpush.msra.mxu0 %v1489
    %1594 = vmatpush.msra.mxu0 %v1488
    %1595 = vmatpush.msra.mxu0 %v1487
    %1596 = vmatpush.msra.mxu0 %v1486
    %1597 = vmatpush.msra.mxu0 %v1485
    %1598 = vmatmul.f32.gmra.mxu0 %v1553
    %v1599 = vpop.f32.mrf.mxu0
    %v1600 = vadd.f32 0.0, %v1599
    %1601 = vmatmul.f32.gmra.mxu0 %v1555
    %v1602 = vpop.f32.mrf.mxu0
    %v1603 = vadd.f32 0.0, %v1602
    %1604 = vdwg.mxu0
    %v1605 = vadd.f32 %v1462, %v1600
    %v1606 = vadd.f32 %v1463, %v1603
    %v1607 = vmax.f32 %v1522, %v1550
    %v1608 = vmax.f32 %v1523, %v1551
    %v1609 = vmax.f32 %v1580, %v1605
    %v1610 = vmax.f32 %v1581, %v1606
    %v1611 = vmax.f32 %v1607, %v1609
    %v1612 = vmax.f32 %v1608, %v1610
    %v1613 = vld [vmem:[%s6] sm:$0x1]
    %v1615 = vperm.slane %v1613, 0
    %v1617 = vadd.f32 %v1611, %v1615
    %v1618 = vadd.f32 %v1612, %v1615
    %v1619 = vmax.f32 %v1617, 0.0
    %v1620 = vmax.f32 %v1618, 0.0
    %v1622 = vrot.slane %v1619, 4
    %vm1624 = vcmask 1040384
    %v1625 = vsel %vm1624, %v1619, %v1622
    %v1626 = vld [vmem:[%s7] sm:$0xff]
    %v1627 = vld [vmem:[%s7 + $0x8] sm:$0xff]
    %v1628 = vld [vmem:[%s7 + $0x10] sm:$0xff]
    %v1629 = vld [vmem:[%s7 + $0x18] sm:$0xff]
    %v1630 = vld [vmem:[%s7 + $0x20] sm:$0xff]
    %v1631 = vld [vmem:[%s7 + $0x28] sm:$0xff]
    %v1632 = vld [vmem:[%s7 + $0x30] sm:$0xff]
    %v1633 = vld [vmem:[%s7 + $0x38] sm:$0xff]
    %v1634 = vld [vmem:[%s7 + $0x40] sm:$0xff]
    %v1635 = vld [vmem:[%s7 + $0x48] sm:$0xff]
    %v1636 = vrot.slane %v1619, 1
    %v1638 = vrot.slane %v1619, 5
    %v1640 = vsel %vm1624, %v1636, %v1638
    %s1641 = scalar_lea.vmem %s7, 80
    %v1642 = vld [vmem:[%s1641] sm:$0xff]
    %v1643 = vld [vmem:[%s1641 + $0x8] sm:$0xff]
    %v1644 = vld [vmem:[%s1641 + $0x10] sm:$0xff]
    %v1645 = vld [vmem:[%s1641 + $0x18] sm:$0xff]
    %v1646 = vld [vmem:[%s1641 + $0x20] sm:$0xff]
    %v1647 = vld [vmem:[%s1641 + $0x28] sm:$0xff]
    %v1648 = vld [vmem:[%s1641 + $0x30] sm:$0xff]
    %v1649 = vld [vmem:[%s1641 + $0x38] sm:$0xff]
    %v1650 = vld [vmem:[%s1641 + $0x40] sm:$0xff]
    %v1651 = vld [vmem:[%s1641 + $0x48] sm:$0xff]
    %vm1652 = vcmask 654336
    %v1654 = vsel %vm1652, %v1640, 0
    %1656 = vmatpush.msra.mxu0 0.0
    %1657 = vmatpush.msra.mxu0 0.0
    %1658 = vmatpush.msra.mxu0 0.0
    %1659 = vmatpush.msra.mxu0 0.0
    %1660 = vmatpush.msra.mxu0 0.0
    %1661 = vmatpush.msra.mxu0 0.0
    %1662 = vmatpush.msra.mxu0 %v1651
    %1663 = vmatpush.msra.mxu0 %v1650
    %1664 = vmatpush.msra.mxu0 %v1649
    %1665 = vmatpush.msra.mxu0 %v1648
    %1666 = vmatpush.msra.mxu0 %v1647
    %1667 = vmatpush.msra.mxu0 %v1646
    %1668 = vmatpush.msra.mxu0 %v1645
    %1669 = vmatpush.msra.mxu0 %v1644
    %1670 = vmatpush.msra.mxu0 %v1643
    %1671 = vmatpush.msra.mxu0 %v1642
    %1672 = vmatmul.f32.gmra.mxu0 %v1654
    %v1673 = vpop.f32.mrf.mxu0
    %v1674 = vadd.f32 0.0, %v1673
    %1675 = vdwg.mxu0
    %v1677 = vsel %vm1652, %v1625, 0
    %1679 = vmatpush.msra.mxu0 0.0
    %1680 = vmatpush.msra.mxu0 0.0
    %1681 = vmatpush.msra.mxu0 0.0
    %1682 = vmatpush.msra.mxu0 0.0
    %1683 = vmatpush.msra.mxu0 0.0
    %1684 = vmatpush.msra.mxu0 0.0
    %1685 = vmatpush.msra.mxu0 %v1635
    %1686 = vmatpush.msra.mxu0 %v1634
    %1687 = vmatpush.msra.mxu0 %v1633
    %1688 = vmatpush.msra.mxu0 %v1632
    %1689 = vmatpush.msra.mxu0 %v1631
    %1690 = vmatpush.msra.mxu0 %v1630
    %1691 = vmatpush.msra.mxu0 %v1629
    %1692 = vmatpush.msra.mxu0 %v1628
    %1693 = vmatpush.msra.mxu0 %v1627
    %1694 = vmatpush.msra.mxu0 %v1626
    %1695 = vmatmul.f32.gmra.mxu0 %v1677
    %v1696 = vpop.f32.mrf.mxu0
    %v1697 = vadd.f32 %v1674, %v1696
    %1698 = vdwg.mxu0
    %v1699 = vrot.slane %v1619, 2
    %v1701 = vrot.slane %v1619, 6
    %v1703 = vsel %vm1624, %v1699, %v1701
    %s1704 = scalar_lea.vmem %s7, 160
    %v1705 = vld [vmem:[%s1704] sm:$0xff]
    %v1706 = vld [vmem:[%s1704 + $0x8] sm:$0xff]
    %v1707 = vld [vmem:[%s1704 + $0x10] sm:$0xff]
    %v1708 = vld [vmem:[%s1704 + $0x18] sm:$0xff]
    %v1709 = vld [vmem:[%s1704 + $0x20] sm:$0xff]
    %v1710 = vld [vmem:[%s1704 + $0x28] sm:$0xff]
    %v1711 = vld [vmem:[%s1704 + $0x30] sm:$0xff]
    %v1712 = vld [vmem:[%s1704 + $0x38] sm:$0xff]
    %v1713 = vld [vmem:[%s1704 + $0x40] sm:$0xff]
    %v1714 = vld [vmem:[%s1704 + $0x48] sm:$0xff]
    %v1716 = vsel %vm1652, %v1703, 0
    %1718 = vmatpush.msra.mxu0 0.0
    %1719 = vmatpush.msra.mxu0 0.0
    %1720 = vmatpush.msra.mxu0 0.0
    %1721 = vmatpush.msra.mxu0 0.0
    %1722 = vmatpush.msra.mxu0 0.0
    %1723 = vmatpush.msra.mxu0 0.0
    %1724 = vmatpush.msra.mxu0 %v1714
    %1725 = vmatpush.msra.mxu0 %v1713
    %1726 = vmatpush.msra.mxu0 %v1712
    %1727 = vmatpush.msra.mxu0 %v1711
    %1728 = vmatpush.msra.mxu0 %v1710
    %1729 = vmatpush.msra.mxu0 %v1709
    %1730 = vmatpush.msra.mxu0 %v1708
    %1731 = vmatpush.msra.mxu0 %v1707
    %1732 = vmatpush.msra.mxu0 %v1706
    %1733 = vmatpush.msra.mxu0 %v1705
    %1734 = vmatmul.f32.gmra.mxu0 %v1716
    %v1735 = vpop.f32.mrf.mxu0
    %v1736 = vadd.f32 0.0, %v1735
    %1737 = vdwg.mxu0
    %v1738 = vadd.f32 %v1697, %v1736
    %v1739 = vrot.slane %v1619, 3
    %v1742 = vrot.slane %v1620, 7
    %v1744 = vsel %vm1624, %v1739, %v1742
    %s1745 = scalar_lea.vmem %s7, 240
    %v1746 = vld [vmem:[%s1745] sm:$0xff]
    %v1747 = vld [vmem:[%s1745 + $0x8] sm:$0xff]
    %v1748 = vld [vmem:[%s1745 + $0x10] sm:$0xff]
    %v1749 = vld [vmem:[%s1745 + $0x18] sm:$0xff]
    %v1750 = vld [vmem:[%s1745 + $0x20] sm:$0xff]
    %v1751 = vld [vmem:[%s1745 + $0x28] sm:$0xff]
    %v1752 = vld [vmem:[%s1745 + $0x30] sm:$0xff]
    %v1753 = vld [vmem:[%s1745 + $0x38] sm:$0xff]
    %v1754 = vld [vmem:[%s1745 + $0x40] sm:$0xff]
    %v1755 = vld [vmem:[%s1745 + $0x48] sm:$0xff]
    %v1757 = vsel %vm1652, %v1744, 0
    %1759 = vmatpush.msra.mxu0 0.0
    %1760 = vmatpush.msra.mxu0 0.0
    %1761 = vmatpush.msra.mxu0 0.0
    %1762 = vmatpush.msra.mxu0 0.0
    %1763 = vmatpush.msra.mxu0 0.0
    %1764 = vmatpush.msra.mxu0 0.0
    %1765 = vmatpush.msra.mxu0 %v1755
    %1766 = vmatpush.msra.mxu0 %v1754
    %1767 = vmatpush.msra.mxu0 %v1753
    %1768 = vmatpush.msra.mxu0 %v1752
    %1769 = vmatpush.msra.mxu0 %v1751
    %1770 = vmatpush.msra.mxu0 %v1750
    %1771 = vmatpush.msra.mxu0 %v1749
    %1772 = vmatpush.msra.mxu0 %v1748
    %1773 = vmatpush.msra.mxu0 %v1747
    %1774 = vmatpush.msra.mxu0 %v1746
    %1775 = vmatmul.f32.gmra.mxu0 %v1757
    %v1776 = vpop.f32.mrf.mxu0
    %v1777 = vadd.f32 0.0, %v1776
    %1778 = vdwg.mxu0
    %v1779 = vadd.f32 %v1738, %v1777
    %v1780 = vsel %vm1624, %v1622, %v1620
    %s1781 = scalar_lea.vmem %s7, 320
    %v1782 = vld [vmem:[%s1781] sm:$0xff]
    %v1783 = vld [vmem:[%s1781 + $0x8] sm:$0xff]
    %v1784 = vld [vmem:[%s1781 + $0x10] sm:$0xff]
    %v1785 = vld [vmem:[%s1781 + $0x18] sm:$0xff]
    %v1786 = vld [vmem:[%s1781 + $0x20] sm:$0xff]
    %v1787 = vld [vmem:[%s1781 + $0x28] sm:$0xff]
    %v1788 = vld [vmem:[%s1781 + $0x30] sm:$0xff]
    %v1789 = vld [vmem:[%s1781 + $0x38] sm:$0xff]
    %v1790 = vld [vmem:[%s1781 + $0x40] sm:$0xff]
    %v1791 = vld [vmem:[%s1781 + $0x48] sm:$0xff]
    %v1793 = vsel %vm1652, %v1780, 0
    %1795 = vmatpush.msra.mxu0 0.0
    %1796 = vmatpush.msra.mxu0 0.0
    %1797 = vmatpush.msra.mxu0 0.0
    %1798 = vmatpush.msra.mxu0 0.0
    %1799 = vmatpush.msra.mxu0 0.0
    %1800 = vmatpush.msra.mxu0 0.0
    %1801 = vmatpush.msra.mxu0 %v1791
    %1802 = vmatpush.msra.mxu0 %v1790
    %1803 = vmatpush.msra.mxu0 %v1789
    %1804 = vmatpush.msra.mxu0 %v1788
    %1805 = vmatpush.msra.mxu0 %v1787
    %1806 = vmatpush.msra.mxu0 %v1786
    %1807 = vmatpush.msra.mxu0 %v1785
    %1808 = vmatpush.msra.mxu0 %v1784
    %1809 = vmatpush.msra.mxu0 %v1783
    %1810 = vmatpush.msra.mxu0 %v1782
    %1811 = vmatmul.f32.gmra.mxu0 %v1793
    %v1812 = vpop.f32.mrf.mxu0
    %v1813 = vadd.f32 0.0, %v1812
    %1814 = vdwg.mxu0
    %v1815 = vadd.f32 %v1779, %v1813
    %v1816 = vld [vmem:[%s8] sm:$0x1]
    %v1818 = vperm.slane %v1816, 0
    %v1820 = vadd.f32 %v1815, %v1818
    %v1821 = vmax.f32 %v1820, 0.0
    %v1822 = vld [vmem:[%s9] sm:$0xff]
    %v1823 = vld [vmem:[%s9 + $0x8] sm:$0xff]
    %v1824 = vld [vmem:[%s9 + $0x10] sm:$0xff]
    %v1825 = vld [vmem:[%s9 + $0x18] sm:$0xff]
    %v1826 = vld [vmem:[%s9 + $0x20] sm:$0xff]
    %v1827 = vld [vmem:[%s9 + $0x28] sm:$0xff]
    %v1828 = vld [vmem:[%s9 + $0x30] sm:$0xff]
    %v1829 = vld [vmem:[%s9 + $0x38] sm:$0xff]
    %v1830 = vld [vmem:[%s9 + $0x40] sm:$0xff]
    %v1831 = vld [vmem:[%s9 + $0x48] sm:$0xff]
    %v1832 = vld [vmem:[%s9 + $0x50] sm:$0xff]
    %v1833 = vld [vmem:[%s9 + $0x58] sm:$0xff]
    %v1834 = vld [vmem:[%s9 + $0x60] sm:$0xff]
    %v1835 = vld [vmem:[%s9 + $0x68] sm:$0xff]
    %v1836 = vld [vmem:[%s9 + $0x70] sm:$0xff]
    %v1837 = vld [vmem:[%s10] sm:$0x1]
    %v1839 = vperm.slane %v1837, 0
    %vm1841 = vcmask 982016
    %v1843 = vsel %vm1841, %v1821, 0
    %1845 = vmatpush.msra.mxu0 0.0
    %1846 = vmatpush.msra.mxu0 %v1836
    %1847 = vmatpush.msra.mxu0 %v1835
    %1848 = vmatpush.msra.mxu0 %v1834
    %1849 = vmatpush.msra.mxu0 %v1833
    %1850 = vmatpush.msra.mxu0 %v1832
    %1851 = vmatpush.msra.mxu0 %v1831
    %1852 = vmatpush.msra.mxu0 %v1830
    %1853 = vmatpush.msra.mxu0 %v1829
    %1854 = vmatpush.msra.mxu0 %v1828
    %1855 = vmatpush.msra.mxu0 %v1827
    %1856 = vmatpush.msra.mxu0 %v1826
    %1857 = vmatpush.msra.mxu0 %v1825
    %1858 = vmatpush.msra.mxu0 %v1824
    %1859 = vmatpush.msra.mxu0 %v1823
    %1860 = vmatpush.msra.mxu0 %v1822
    %1861 = vmatmul.f32.gmra.mxu0 %v1843
    %v1862 = vpop.f32.mrf.mxu0
    %v1863 = vadd.f32 %v1839, %v1862
    %1864 = vdwg.mxu0
    %1865 = vst [vmem:[#allocation3] sm:$0x3] %v1863
    // Predicated region
    $region46: #{mini_lenet5_forward.1} parent=1 // pred_check
      _
    $region47: #{mini_lenet5_forward.1} parent=1 // pred_check_branch
      %1867 = sbr.rel (0) target = $region49
    $region48: #{mini_lenet5_forward.1} parent=1 // pred_region
      %1869 = vsyncadd [#allocation4], 0
      %s1871 = sshll.u32 [#allocation3], 4
      %s1872 = int_to_ptr.vmem [resolvable:$true] %s1871
      %s1873 = sshll.u32 %s11, 4
      %s1874 = int_to_ptr.hbm [resolvable:$true] %s1873
      %1876 = dma.vmem_to_hbm [thread:$0]  %s1872, 32, %s1874, [#allocation4]
    $region49: #{mini_lenet5_forward.1} parent=1 // pred_fallthru
      _
    // Predicated region
    $region50: #{mini_lenet5_forward.1} parent=1 // pred_check
      _
    $region51: #{mini_lenet5_forward.1} parent=1 // pred_check_branch
      %1878 = sbr.rel (0) target = $region53
    $region52: #{mini_lenet5_forward.1} parent=1 // pred_region
      %1880 = dma.done [#allocation4], 32
    $region53: #{mini_lenet5_forward.1} parent=1 // pred_fallthru
      _
    %1881 = vsyncpa [#allocation4], 1

</llo_original>
